<compile_context>
chip_gen: v7x
topology: tpu7x:2x2x1
jax: 0.10.0
libtpu: 0.0.40
codegen_flags: <defaults>
</compile_context>

<pallas_src>
import math
from functools import partial

import jax
import jax.numpy as jnp
from jax import lax
from jax.experimental import pallas as pl
from jax.experimental.pallas import tpu as pltpu

_EPS = 1e-5


def _bn_train(y, gamma, beta):
    """Train-mode BatchNorm over axis 0 (rows = pixels); all math in f32."""
    mean = jnp.mean(y, axis=0, keepdims=True)
    var = jnp.mean(jnp.square(y - mean), axis=0, keepdims=True)   # biased var
    return (y - mean) * lax.rsqrt(var + _EPS) * gamma + beta


# ------------------------------ fused kernel ------------------------------- #

def _bottleneck_kernel(N, H, W, DC,
                       x_ref, w1_ref, g1_ref, b1_ref,
                       w2_ref, g2_ref, b2_ref,
                       w3_ref, g3_ref, b3_ref,
                       o_ref, pad_ref):
    """Fused ResNeXt bottleneck forward, fully VMEM-resident.

    x_ref  : (M, Cin)  f32   flattened NHWC pixels; also the residual source
    w1_ref : (Cin, DC) bf16  1x1 reduce
    w2_ref : (9, DC, DC) bf16  per-tap block-diagonal grouped 3x3 weights
    w3_ref : (DC, Cout) bf16 1x1 expand
    g*/b*  : (1, C)    f32   BN affine params
    o_ref  : (M, Cout) f32
    pad_ref: (N, H+2, W+2, DC) f32 VMEM scratch (zero-padded y1)
    """
    M = N * H * W
    x = x_ref[...]                                               # f32 (M, Cin)

    # ---- stage 1: conv_reduce (1x1) + bn_reduce + relu -------------------
    y1 = jnp.dot(x.astype(jnp.bfloat16), w1_ref[...],
                 preferred_element_type=jnp.float32)             # (M, DC) f32
    y1 = jnp.maximum(_bn_train(y1, g1_ref[...], b1_ref[...]), 0.0)

    # ---- stage 2: grouped 3x3 (pad=1, stride=1) as 9-tap accumulation ----
    pad_ref[...] = jnp.zeros_like(pad_ref)
    pad_ref[:, 1:H + 1, 1:W + 1, :] = y1.reshape(N, H, W, DC)

    acc = jnp.zeros((M, DC), jnp.float32)
    for t in range(9):                      # static unrolled 9-tap loop
        dy, dx = t // 3, t % 3
        tap = pad_ref[:, dy:dy + H, dx:dx + W, :]                # (N,H,W,DC)
        acc = acc + jnp.dot(tap.reshape(M, DC).astype(jnp.bfloat16),
                            w2_ref[t],
                            preferred_element_type=jnp.float32)
    y2 = jnp.maximum(_bn_train(acc, g2_ref[...], b2_ref[...]), 0.0)

    # ---- stage 3: conv_expand (1x1) + bn_expand + residual + relu --------
    y3 = jnp.dot(y2.astype(jnp.bfloat16), w3_ref[...],
                 preferred_element_type=jnp.float32)             # (M, Cout)
    y3 = _bn_train(y3, g3_ref[...], b3_ref[...])
    o_ref[...] = jnp.maximum(y3 + x, 0.0).astype(o_ref.dtype)


def _full_spec(shape):
    # Whole array as one block (everything resident in VMEM).
    return pl.BlockSpec(shape, lambda i: (0,) * len(shape))


@jax.jit
def _forward(x_nchw, w1, g1, b1, w2, g2, b2, w3, g3, b3):
    N, Cin, H, W = x_nchw.shape
    DC = w1.shape[1]
    Cout = w3.shape[1]
    M = N * H * W

    x_flat = jnp.transpose(x_nchw, (0, 2, 3, 1)).astype(jnp.float32)
    x_flat = x_flat.reshape(M, Cin)

    args = (x_flat, w1, g1, b1, w2, g2, b2, w3, g3, b3)
    out_flat = pl.pallas_call(
        partial(_bottleneck_kernel, N, H, W, DC),
        out_shape=jax.ShapeDtypeStruct((M, Cout), jnp.float32),
        grid=(1,),
        in_specs=[_full_spec(a.shape) for a in args],
        out_specs=_full_spec((M, Cout)),
        scratch_shapes=[pltpu.VMEM((N, H + 2, W + 2, DC), jnp.float32)],
        compiler_params=pltpu.CompilerParams(
            dimension_semantics=("arbitrary",)),
    )(*args)

    out = out_flat.reshape(N, H, W, Cout)
    return jnp.transpose(out, (0, 3, 1, 2))                      # back to NCHW


# ------------------------------- Module glue ------------------------------- #

class ResNeXtBottleneckPallas:
    expansion = 4

    def __init__(self, inplanes, planes, cardinality, base_width, stride=1,
                 key=None):
        assert key is not None
        D = int(math.floor(planes * (base_width / 64.0)))
        C = cardinality
        DC = D * C
        out_planes = planes * 4
        self.inplanes, self.planes = inplanes, planes
        self.cardinality, self.D, self.DC = C, D, DC
        self.out_planes, self.stride = out_planes, stride
        # TODO(synk): `downsample` submodule not modeled (None in this config);
        # residual path requires inplanes == planes*4 and stride == 1.
        assert stride == 1 and inplanes == out_planes, (
            "identity residual path requires stride==1 and inplanes==planes*4")

        k0, k1, k2 = jax.random.split(key, 3)
        # Raw conv weights in PyTorch OIHW layout, bias=False (used by reference).
        self.w_reduce = (math.sqrt(2.0 / inplanes) *
                         jax.random.normal(k0, (DC, inplanes, 1, 1), jnp.float32))
        self.w_conv = (math.sqrt(2.0 / (D * 9)) *
                       jax.random.normal(k1, (DC, D, 3, 3), jnp.float32))
        self.w_expand = (math.sqrt(2.0 / DC) *
                         jax.random.normal(k2, (out_planes, DC, 1, 1), jnp.float32))
        # BatchNorm affine params (deterministic, non-trivial).
        self.g_reduce = 1.0 + 0.01 * jnp.arange(DC, dtype=jnp.float32)
        self.b_reduce = 0.02 * jnp.arange(DC, dtype=jnp.float32) - 0.1
        self.g_bn = 1.0 - 0.005 * jnp.arange(DC, dtype=jnp.float32)
        self.b_bn = 0.01 * jnp.arange(DC, dtype=jnp.float32)
        self.g_expand = 1.0 + 0.02 * jnp.arange(out_planes, dtype=jnp.float32)
        self.b_expand = -0.03 * jnp.arange(out_planes, dtype=jnp.float32)

        # ---- hoisted kernel-ready parameters (built ONCE, not per call) ----
        # 1x1 convs as channels-last matmul weights, bf16 operands for the MXU.
        self.w1 = self.w_reduce[:, :, 0, 0].T.astype(jnp.bfloat16)   # (Cin, DC)
        self.w3 = self.w_expand[:, :, 0, 0].T.astype(jnp.bfloat16)   # (DC, Cout)
        # Grouped 3x3: per-tap block-diagonal (DC_in, DC_out) weight matrices.
        w_g = self.w_conv.reshape(C, D, D, 3, 3)           # (g, co, ci, kh, kw)
        taps = jnp.zeros((3, 3, DC, DC), jnp.float32)      # (kh, kw, ci, co)
        for g in range(C):
            blk = jnp.transpose(w_g[g], (2, 3, 1, 0))      # (kh, kw, ci, co)
            taps = taps.at[:, :, g * D:(g + 1) * D, g * D:(g + 1) * D].set(blk)
        self.w2_taps = taps.reshape(9, DC, DC).astype(jnp.bfloat16)
        # BN affine params as (1, C) f32 rows (broadcast once inside kernel).
        self.g1 = self.g_reduce.reshape(1, DC)
        self.b1 = self.b_reduce.reshape(1, DC)
        self.g2 = self.g_bn.reshape(1, DC)
        self.b2 = self.b_bn.reshape(1, DC)
        self.g3 = self.g_expand.reshape(1, out_planes)
        self.b3 = self.b_expand.reshape(1, out_planes)

    def __call__(self, x_nchw):
        return _forward(x_nchw, self.w1, self.g1, self.b1,
                        self.w2_taps, self.g2, self.b2,
                        self.w3, self.g3, self.b3)


# ------------------------- pure-JAX reference check ------------------------ #

def _bn_train_nchw(x, gamma, beta):
    mean = jnp.mean(x, axis=(0, 2, 3), keepdims=True)
    var = jnp.mean(jnp.square(x - mean), axis=(0, 2, 3), keepdims=True)
    return ((x - mean) * lax.rsqrt(var + _EPS) * gamma.reshape(1, -1, 1, 1)
            + beta.reshape(1, -1, 1, 1))


def reference_forward(m, x):
    dn = ("NCHW", "OIHW", "NCHW")
    hp = lax.Precision.HIGHEST
    y = lax.conv_general_dilated(x, m.w_reduce, (1, 1), "VALID",
                                 dimension_numbers=dn, precision=hp)
    y = jax.nn.relu(_bn_train_nchw(y, m.g_reduce, m.b_reduce))
    y = lax.conv_general_dilated(y, m.w_conv, (m.stride, m.stride),
                                 ((1, 1), (1, 1)), dimension_numbers=dn,
                                 feature_group_count=m.cardinality, precision=hp)
    y = jax.nn.relu(_bn_train_nchw(y, m.g_bn, m.b_bn))
    y = lax.conv_general_dilated(y, m.w_expand, (1, 1), "VALID",
                                 dimension_numbers=dn, precision=hp)
    y = _bn_train_nchw(y, m.g_expand, m.b_expand)
    return jax.nn.relu(x + y)


# ----------------------------------- main ----------------------------------- #

if __name__ == "__main__":
    key = jax.random.PRNGKey(0)
    k_x, k_w = jax.random.split(key)

    # inplanes must equal planes*4 (downsample=None), stride=1.
    inplanes, planes, cardinality, base_width = 32, 8, 4, 64
    N, H, W = 2, 8, 8
    x = jax.random.normal(k_x, (N, inplanes, H, W), jnp.float32)

    block = ResNeXtBottleneckPallas(inplanes, planes, cardinality, base_width,
                                    stride=1, key=k_w)

    out = jax.block_until_ready(block(x))
    ref = jax.block_until_ready(reference_forward(block, x))

    assert out.shape == (N, planes * 4, H, W), out.shape
    assert jnp.all(jnp.isfinite(out))
    # Tolerance accounts for bf16 MXU operands (f32 accumulation / BN stats);
    # structural bugs would produce O(1) errors.
    assert jnp.allclose(out, ref, atol=3e-2, rtol=3e-2), (
        float(jnp.max(jnp.abs(out - ref))))

    print("KERNEL_OK")
</pallas_src>

<mosaic_0001>
module attributes {stable_mosaic.version = 11 : i64} {
  func.func @_bottleneck_kernel(%arg0: i32, %arg1: memref<128x32xf32, #tpu.memory_space<vmem>>, %arg2: memref<32x32xbf16, #tpu.memory_space<vmem>>, %arg3: memref<1x32xf32, #tpu.memory_space<vmem>>, %arg4: memref<1x32xf32, #tpu.memory_space<vmem>>, %arg5: memref<9x32x32xbf16, #tpu.memory_space<vmem>>, %arg6: memref<1x32xf32, #tpu.memory_space<vmem>>, %arg7: memref<1x32xf32, #tpu.memory_space<vmem>>, %arg8: memref<32x32xbf16, #tpu.memory_space<vmem>>, %arg9: memref<1x32xf32, #tpu.memory_space<vmem>>, %arg10: memref<1x32xf32, #tpu.memory_space<vmem>>, %arg11: memref<128x32xf32, #tpu.memory_space<vmem>>, %arg12: memref<2x10x10x32xf32, #tpu.memory_space<vmem>>) attributes {dimension_semantics = [#tpu.dimension_semantics<arbitrary>], iteration_bounds = array<i64: 1>, scalar_prefetch = 0 : i64, scratch_operands = 1 : i64, tpu.core_type = #tpu.core_type<tc>, window_params = [{pipeline_mode = #tpu.pipeline_mode<synchronous>, transform_indices = @transform_0, window_bounds = array<i64: 128, 32>}, {pipeline_mode = #tpu.pipeline_mode<synchronous>, transform_indices = @transform_1, window_bounds = array<i64: 32, 32>}, {pipeline_mode = #tpu.pipeline_mode<synchronous>, transform_indices = @transform_2, window_bounds = array<i64: 1, 32>}, {pipeline_mode = #tpu.pipeline_mode<synchronous>, transform_indices = @transform_3, window_bounds = array<i64: 1, 32>}, {pipeline_mode = #tpu.pipeline_mode<synchronous>, transform_indices = @transform_4, window_bounds = array<i64: 9, 32, 32>}, {pipeline_mode = #tpu.pipeline_mode<synchronous>, transform_indices = @transform_5, window_bounds = array<i64: 1, 32>}, {pipeline_mode = #tpu.pipeline_mode<synchronous>, transform_indices = @transform_6, window_bounds = array<i64: 1, 32>}, {pipeline_mode = #tpu.pipeline_mode<synchronous>, transform_indices = @transform_7, window_bounds = array<i64: 32, 32>}, {pipeline_mode = #tpu.pipeline_mode<synchronous>, transform_indices = @transform_8, window_bounds = array<i64: 1, 32>}, {pipeline_mode = #tpu.pipeline_mode<synchronous>, transform_indices = @transform_9, window_bounds = array<i64: 1, 32>}, {pipeline_mode = #tpu.pipeline_mode<synchronous>, transform_indices = @transform_10, window_bounds = array<i64: 128, 32>}]} {
    %c0 = arith.constant 0 : index
    %c0_0 = arith.constant 0 : index
    %0 = vector.load %arg1[%c0, %c0_0] : memref<128x32xf32, #tpu.memory_space<vmem>>, vector<128x32xf32>
    %1 = arith.truncf %0 : vector<128x32xf32> to vector<128x32xbf16>
    %c0_1 = arith.constant 0 : index
    %c0_2 = arith.constant 0 : index
    %2 = vector.load %arg2[%c0_1, %c0_2] : memref<32x32xbf16, #tpu.memory_space<vmem>>, vector<32x32xbf16>
    %cst = arith.constant dense<0.000000e+00> : vector<128x32xf32>
    %3 = tpu.matmul %1, %2, %cst {dimension_numbers = #tpu.dot_dimension_numbers<[1], [0], [0], [1], [0, 0, 1, 1], [], []>} : vector<128x32xbf16>, vector<32x32xbf16>, vector<128x32xf32> -> vector<128x32xf32>
    %c0_3 = arith.constant 0 : index
    %c0_4 = arith.constant 0 : index
    %4 = vector.load %arg3[%c0_3, %c0_4] : memref<1x32xf32, #tpu.memory_space<vmem>>, vector<1x32xf32>
    %c0_5 = arith.constant 0 : index
    %c0_6 = arith.constant 0 : index
    %5 = vector.load %arg4[%c0_5, %c0_6] : memref<1x32xf32, #tpu.memory_space<vmem>>, vector<1x32xf32>
    %cst_7 = arith.constant dense<0.000000e+00> : vector<32xf32>
    %6 = vector.multi_reduction <add>, %3, %cst_7 [0] : vector<128x32xf32> to vector<32xf32>
    %7 = vector.shape_cast %6 : vector<32xf32> to vector<1x32xf32>
    %cst_8 = arith.constant 1.280000e+02 : f32
    %8 = vector.broadcast %cst_8 : f32 to vector<1x32xf32>
    %9 = arith.divf %7, %8 : vector<1x32xf32>
    %10 = vector.broadcast %9 : vector<1x32xf32> to vector<128x32xf32>
    %11 = arith.subf %3, %10 : vector<128x32xf32>
    %12 = arith.mulf %11, %11 : vector<128x32xf32>
    %cst_9 = arith.constant dense<0.000000e+00> : vector<32xf32>
    %13 = vector.multi_reduction <add>, %12, %cst_9 [0] : vector<128x32xf32> to vector<32xf32>
    %14 = vector.shape_cast %13 : vector<32xf32> to vector<1x32xf32>
    %cst_10 = arith.constant 1.280000e+02 : f32
    %15 = vector.broadcast %cst_10 : f32 to vector<1x32xf32>
    %16 = arith.divf %14, %15 : vector<1x32xf32>
    %17 = vector.broadcast %9 : vector<1x32xf32> to vector<128x32xf32>
    %18 = arith.subf %3, %17 : vector<128x32xf32>
    %cst_11 = arith.constant 9.99999974E-6 : f32
    %19 = vector.broadcast %cst_11 : f32 to vector<1x32xf32>
    %20 = arith.addf %16, %19 : vector<1x32xf32>
    %21 = math.rsqrt %20 : vector<1x32xf32>
    %22 = vector.broadcast %21 : vector<1x32xf32> to vector<128x32xf32>
    %23 = arith.mulf %18, %22 : vector<128x32xf32>
    %24 = vector.broadcast %4 : vector<1x32xf32> to vector<128x32xf32>
    %25 = arith.mulf %23, %24 : vector<128x32xf32>
    %26 = vector.broadcast %5 : vector<1x32xf32> to vector<128x32xf32>
    %27 = arith.addf %25, %26 : vector<128x32xf32>
    %cst_12 = arith.constant 0.000000e+00 : f32
    %28 = vector.broadcast %cst_12 : f32 to vector<128x32xf32>
    %29 = arith.maximumf %27, %28 : vector<128x32xf32>
    %cst_13 = arith.constant 0.000000e+00 : f32
    %30 = vector.broadcast %cst_13 : f32 to vector<2x10x10x32xf32>
    %c0_14 = arith.constant 0 : index
    %c0_15 = arith.constant 0 : index
    %c0_16 = arith.constant 0 : index
    %c0_17 = arith.constant 0 : index
    %31 = vector.load %arg12[%c0_14, %c0_15, %c0_16, %c0_17] : memref<2x10x10x32xf32, #tpu.memory_space<vmem>>, vector<2x10x10x32xf32>
    tpu.vector_store %arg12[%c0_14, %c0_15, %c0_16, %c0_17], %30 {strides = array<i32>} : memref<2x10x10x32xf32, #tpu.memory_space<vmem>>, vector<2x10x10x32xf32>,
    %32 = vector.shape_cast %29 : vector<128x32xf32> to vector<2x8x8x32xf32>
    %c0_18 = arith.constant 0 : index
    %c1 = arith.constant 1 : index
    %c1_19 = arith.constant 1 : index
    %c0_20 = arith.constant 0 : index
    %33 = vector.load %arg12[%c0_18, %c1, %c1_19, %c0_20] : memref<2x10x10x32xf32, #tpu.memory_space<vmem>>, vector<2x8x8x32xf32>
    tpu.vector_store %arg12[%c0_18, %c1, %c1_19, %c0_20], %32 {strides = array<i32>} : memref<2x10x10x32xf32, #tpu.memory_space<vmem>>, vector<2x8x8x32xf32>,
    %cst_21 = arith.constant 0.000000e+00 : f32
    %34 = vector.broadcast %cst_21 : f32 to vector<128x32xf32>
    %c0_22 = arith.constant 0 : index
    %c0_23 = arith.constant 0 : index
    %c0_24 = arith.constant 0 : index
    %c0_25 = arith.constant 0 : index
    %35 = vector.load %arg12[%c0_22, %c0_23, %c0_24, %c0_25] : memref<2x10x10x32xf32, #tpu.memory_space<vmem>>, vector<2x8x8x32xf32>
    %36 = vector.shape_cast %35 : vector<2x8x8x32xf32> to vector<128x32xf32>
    %37 = arith.truncf %36 : vector<128x32xf32> to vector<128x32xbf16>
    %c0_26 = arith.constant 0 : index
    %c0_27 = arith.constant 0 : index
    %c0_28 = arith.constant 0 : index
    %38 = vector.load %arg5[%c0_26, %c0_27, %c0_28] : memref<9x32x32xbf16, #tpu.memory_space<vmem>>, vector<1x32x32xbf16>
    %39 = vector.shape_cast %38 : vector<1x32x32xbf16> to vector<32x32xbf16>
    %cst_29 = arith.constant dense<0.000000e+00> : vector<128x32xf32>
    %40 = tpu.matmul %37, %39, %cst_29 {dimension_numbers = #tpu.dot_dimension_numbers<[1], [0], [0], [1], [0, 0, 1, 1], [], []>} : vector<128x32xbf16>, vector<32x32xbf16>, vector<128x32xf32> -> vector<128x32xf32>
    %41 = arith.addf %34, %40 : vector<128x32xf32>
    %c0_30 = arith.constant 0 : index
    %c0_31 = arith.constant 0 : index
    %c1_32 = arith.constant 1 : index
    %c0_33 = arith.constant 0 : index
    %42 = vector.load %arg12[%c0_30, %c0_31, %c1_32, %c0_33] : memref<2x10x10x32xf32, #tpu.memory_space<vmem>>, vector<2x8x8x32xf32>
    %43 = vector.shape_cast %42 : vector<2x8x8x32xf32> to vector<128x32xf32>
    %44 = arith.truncf %43 : vector<128x32xf32> to vector<128x32xbf16>
    %c1_34 = arith.constant 1 : index
    %c0_35 = arith.constant 0 : index
    %c0_36 = arith.constant 0 : index
    %45 = vector.load %arg5[%c1_34, %c0_35, %c0_36] : memref<9x32x32xbf16, #tpu.memory_space<vmem>>, vector<1x32x32xbf16>
    %46 = vector.shape_cast %45 : vector<1x32x32xbf16> to vector<32x32xbf16>
    %cst_37 = arith.constant dense<0.000000e+00> : vector<128x32xf32>
    %47 = tpu.matmul %44, %46, %cst_37 {dimension_numbers = #tpu.dot_dimension_numbers<[1], [0], [0], [1], [0, 0, 1, 1], [], []>} : vector<128x32xbf16>, vector<32x32xbf16>, vector<128x32xf32> -> vector<128x32xf32>
    %48 = arith.addf %41, %47 : vector<128x32xf32>
    %c0_38 = arith.constant 0 : index
    %c0_39 = arith.constant 0 : index
    %c2 = arith.constant 2 : index
    %c0_40 = arith.constant 0 : index
    %49 = vector.load %arg12[%c0_38, %c0_39, %c2, %c0_40] : memref<2x10x10x32xf32, #tpu.memory_space<vmem>>, vector<2x8x8x32xf32>
    %50 = vector.shape_cast %49 : vector<2x8x8x32xf32> to vector<128x32xf32>
    %51 = arith.truncf %50 : vector<128x32xf32> to vector<128x32xbf16>
    %c2_41 = arith.constant 2 : index
    %c0_42 = arith.constant 0 : index
    %c0_43 = arith.constant 0 : index
    %52 = vector.load %arg5[%c2_41, %c0_42, %c0_43] : memref<9x32x32xbf16, #tpu.memory_space<vmem>>, vector<1x32x32xbf16>
    %53 = vector.shape_cast %52 : vector<1x32x32xbf16> to vector<32x32xbf16>
    %cst_44 = arith.constant dense<0.000000e+00> : vector<128x32xf32>
    %54 = tpu.matmul %51, %53, %cst_44 {dimension_numbers = #tpu.dot_dimension_numbers<[1], [0], [0], [1], [0, 0, 1, 1], [], []>} : vector<128x32xbf16>, vector<32x32xbf16>, vector<128x32xf32> -> vector<128x32xf32>
    %55 = arith.addf %48, %54 : vector<128x32xf32>
    %c0_45 = arith.constant 0 : index
    %c1_46 = arith.constant 1 : index
    %c0_47 = arith.constant 0 : index
    %c0_48 = arith.constant 0 : index
    %56 = vector.load %arg12[%c0_45, %c1_46, %c0_47, %c0_48] : memref<2x10x10x32xf32, #tpu.memory_space<vmem>>, vector<2x8x8x32xf32>
    %57 = vector.shape_cast %56 : vector<2x8x8x32xf32> to vector<128x32xf32>
    %58 = arith.truncf %57 : vector<128x32xf32> to vector<128x32xbf16>
    %c3 = arith.constant 3 : index
    %c0_49 = arith.constant 0 : index
    %c0_50 = arith.constant 0 : index
    %59 = vector.load %arg5[%c3, %c0_49, %c0_50] : memref<9x32x32xbf16, #tpu.memory_space<vmem>>, vector<1x32x32xbf16>
    %60 = vector.shape_cast %59 : vector<1x32x32xbf16> to vector<32x32xbf16>
    %cst_51 = arith.constant dense<0.000000e+00> : vector<128x32xf32>
    %61 = tpu.matmul %58, %60, %cst_51 {dimension_numbers = #tpu.dot_dimension_numbers<[1], [0], [0], [1], [0, 0, 1, 1], [], []>} : vector<128x32xbf16>, vector<32x32xbf16>, vector<128x32xf32> -> vector<128x32xf32>
    %62 = arith.addf %55, %61 : vector<128x32xf32>
    %c0_52 = arith.constant 0 : index
    %c1_53 = arith.constant 1 : index
    %c1_54 = arith.constant 1 : index
    %c0_55 = arith.constant 0 : index
    %63 = vector.load %arg12[%c0_52, %c1_53, %c1_54, %c0_55] : memref<2x10x10x32xf32, #tpu.memory_space<vmem>>, vector<2x8x8x32xf32>
    %64 = vector.shape_cast %63 : vector<2x8x8x32xf32> to vector<128x32xf32>
    %65 = arith.truncf %64 : vector<128x32xf32> to vector<128x32xbf16>
    %c4 = arith.constant 4 : index
    %c0_56 = arith.constant 0 : index
    %c0_57 = arith.constant 0 : index
    %66 = vector.load %arg5[%c4, %c0_56, %c0_57] : memref<9x32x32xbf16, #tpu.memory_space<vmem>>, vector<1x32x32xbf16>
    %67 = vector.shape_cast %66 : vector<1x32x32xbf16> to vector<32x32xbf16>
    %cst_58 = arith.constant dense<0.000000e+00> : vector<128x32xf32>
    %68 = tpu.matmul %65, %67, %cst_58 {dimension_numbers = #tpu.dot_dimension_numbers<[1], [0], [0], [1], [0, 0, 1, 1], [], []>} : vector<128x32xbf16>, vector<32x32xbf16>, vector<128x32xf32> -> vector<128x32xf32>
    %69 = arith.addf %62, %68 : vector<128x32xf32>
    %c0_59 = arith.constant 0 : index
    %c1_60 = arith.constant 1 : index
    %c2_61 = arith.constant 2 : index
    %c0_62 = arith.constant 0 : index
    %70 = vector.load %arg12[%c0_59, %c1_60, %c2_61, %c0_62] : memref<2x10x10x32xf32, #tpu.memory_space<vmem>>, vector<2x8x8x32xf32>
    %71 = vector.shape_cast %70 : vector<2x8x8x32xf32> to vector<128x32xf32>
    %72 = arith.truncf %71 : vector<128x32xf32> to vector<128x32xbf16>
    %c5 = arith.constant 5 : index
    %c0_63 = arith.constant 0 : index
    %c0_64 = arith.constant 0 : index
    %73 = vector.load %arg5[%c5, %c0_63, %c0_64] : memref<9x32x32xbf16, #tpu.memory_space<vmem>>, vector<1x32x32xbf16>
    %74 = vector.shape_cast %73 : vector<1x32x32xbf16> to vector<32x32xbf16>
    %cst_65 = arith.constant dense<0.000000e+00> : vector<128x32xf32>
    %75 = tpu.matmul %72, %74, %cst_65 {dimension_numbers = #tpu.dot_dimension_numbers<[1], [0], [0], [1], [0, 0, 1, 1], [], []>} : vector<128x32xbf16>, vector<32x32xbf16>, vector<128x32xf32> -> vector<128x32xf32>
    %76 = arith.addf %69, %75 : vector<128x32xf32>
    %c0_66 = arith.constant 0 : index
    %c2_67 = arith.constant 2 : index
    %c0_68 = arith.constant 0 : index
    %c0_69 = arith.constant 0 : index
    %77 = vector.load %arg12[%c0_66, %c2_67, %c0_68, %c0_69] : memref<2x10x10x32xf32, #tpu.memory_space<vmem>>, vector<2x8x8x32xf32>
    %78 = vector.shape_cast %77 : vector<2x8x8x32xf32> to vector<128x32xf32>
    %79 = arith.truncf %78 : vector<128x32xf32> to vector<128x32xbf16>
    %c6 = arith.constant 6 : index
    %c0_70 = arith.constant 0 : index
    %c0_71 = arith.constant 0 : index
    %80 = vector.load %arg5[%c6, %c0_70, %c0_71] : memref<9x32x32xbf16, #tpu.memory_space<vmem>>, vector<1x32x32xbf16>
    %81 = vector.shape_cast %80 : vector<1x32x32xbf16> to vector<32x32xbf16>
    %cst_72 = arith.constant dense<0.000000e+00> : vector<128x32xf32>
    %82 = tpu.matmul %79, %81, %cst_72 {dimension_numbers = #tpu.dot_dimension_numbers<[1], [0], [0], [1], [0, 0, 1, 1], [], []>} : vector<128x32xbf16>, vector<32x32xbf16>, vector<128x32xf32> -> vector<128x32xf32>
    %83 = arith.addf %76, %82 : vector<128x32xf32>
    %c0_73 = arith.constant 0 : index
    %c2_74 = arith.constant 2 : index
    %c1_75 = arith.constant 1 : index
    %c0_76 = arith.constant 0 : index
    %84 = vector.load %arg12[%c0_73, %c2_74, %c1_75, %c0_76] : memref<2x10x10x32xf32, #tpu.memory_space<vmem>>, vector<2x8x8x32xf32>
    %85 = vector.shape_cast %84 : vector<2x8x8x32xf32> to vector<128x32xf32>
    %86 = arith.truncf %85 : vector<128x32xf32> to vector<128x32xbf16>
    %c7 = arith.constant 7 : index
    %c0_77 = arith.constant 0 : index
    %c0_78 = arith.constant 0 : index
    %87 = vector.load %arg5[%c7, %c0_77, %c0_78] : memref<9x32x32xbf16, #tpu.memory_space<vmem>>, vector<1x32x32xbf16>
    %88 = vector.shape_cast %87 : vector<1x32x32xbf16> to vector<32x32xbf16>
    %cst_79 = arith.constant dense<0.000000e+00> : vector<128x32xf32>
    %89 = tpu.matmul %86, %88, %cst_79 {dimension_numbers = #tpu.dot_dimension_numbers<[1], [0], [0], [1], [0, 0, 1, 1], [], []>} : vector<128x32xbf16>, vector<32x32xbf16>, vector<128x32xf32> -> vector<128x32xf32>
    %90 = arith.addf %83, %89 : vector<128x32xf32>
    %c0_80 = arith.constant 0 : index
    %c2_81 = arith.constant 2 : index
    %c2_82 = arith.constant 2 : index
    %c0_83 = arith.constant 0 : index
    %91 = vector.load %arg12[%c0_80, %c2_81, %c2_82, %c0_83] : memref<2x10x10x32xf32, #tpu.memory_space<vmem>>, vector<2x8x8x32xf32>
    %92 = vector.shape_cast %91 : vector<2x8x8x32xf32> to vector<128x32xf32>
    %93 = arith.truncf %92 : vector<128x32xf32> to vector<128x32xbf16>
    %c8 = arith.constant 8 : index
    %c0_84 = arith.constant 0 : index
    %c0_85 = arith.constant 0 : index
    %94 = vector.load %arg5[%c8, %c0_84, %c0_85] : memref<9x32x32xbf16, #tpu.memory_space<vmem>>, vector<1x32x32xbf16>
    %95 = vector.shape_cast %94 : vector<1x32x32xbf16> to vector<32x32xbf16>
    %cst_86 = arith.constant dense<0.000000e+00> : vector<128x32xf32>
    %96 = tpu.matmul %93, %95, %cst_86 {dimension_numbers = #tpu.dot_dimension_numbers<[1], [0], [0], [1], [0, 0, 1, 1], [], []>} : vector<128x32xbf16>, vector<32x32xbf16>, vector<128x32xf32> -> vector<128x32xf32>
    %97 = arith.addf %90, %96 : vector<128x32xf32>
    %c0_87 = arith.constant 0 : index
    %c0_88 = arith.constant 0 : index
    %98 = vector.load %arg6[%c0_87, %c0_88] : memref<1x32xf32, #tpu.memory_space<vmem>>, vector<1x32xf32>
    %c0_89 = arith.constant 0 : index
    %c0_90 = arith.constant 0 : index
    %99 = vector.load %arg7[%c0_89, %c0_90] : memref<1x32xf32, #tpu.memory_space<vmem>>, vector<1x32xf32>
    %cst_91 = arith.constant dense<0.000000e+00> : vector<32xf32>
    %100 = vector.multi_reduction <add>, %97, %cst_91 [0] : vector<128x32xf32> to vector<32xf32>
    %101 = vector.shape_cast %100 : vector<32xf32> to vector<1x32xf32>
    %cst_92 = arith.constant 1.280000e+02 : f32
    %102 = vector.broadcast %cst_92 : f32 to vector<1x32xf32>
    %103 = arith.divf %101, %102 : vector<1x32xf32>
    %104 = vector.broadcast %103 : vector<1x32xf32> to vector<128x32xf32>
    %105 = arith.subf %97, %104 : vector<128x32xf32>
    %106 = arith.mulf %105, %105 : vector<128x32xf32>
    %cst_93 = arith.constant dense<0.000000e+00> : vector<32xf32>
    %107 = vector.multi_reduction <add>, %106, %cst_93 [0] : vector<128x32xf32> to vector<32xf32>
    %108 = vector.shape_cast %107 : vector<32xf32> to vector<1x32xf32>
    %cst_94 = arith.constant 1.280000e+02 : f32
    %109 = vector.broadcast %cst_94 : f32 to vector<1x32xf32>
    %110 = arith.divf %108, %109 : vector<1x32xf32>
    %111 = vector.broadcast %103 : vector<1x32xf32> to vector<128x32xf32>
    %112 = arith.subf %97, %111 : vector<128x32xf32>
    %cst_95 = arith.constant 9.99999974E-6 : f32
    %113 = vector.broadcast %cst_95 : f32 to vector<1x32xf32>
    %114 = arith.addf %110, %113 : vector<1x32xf32>
    %115 = math.rsqrt %114 : vector<1x32xf32>
    %116 = vector.broadcast %115 : vector<1x32xf32> to vector<128x32xf32>
    %117 = arith.mulf %112, %116 : vector<128x32xf32>
    %118 = vector.broadcast %98 : vector<1x32xf32> to vector<128x32xf32>
    %119 = arith.mulf %117, %118 : vector<128x32xf32>
    %120 = vector.broadcast %99 : vector<1x32xf32> to vector<128x32xf32>
    %121 = arith.addf %119, %120 : vector<128x32xf32>
    %cst_96 = arith.constant 0.000000e+00 : f32
    %122 = vector.broadcast %cst_96 : f32 to vector<128x32xf32>
    %123 = arith.maximumf %121, %122 : vector<128x32xf32>
    %124 = arith.truncf %123 : vector<128x32xf32> to vector<128x32xbf16>
    %c0_97 = arith.constant 0 : index
    %c0_98 = arith.constant 0 : index
    %125 = vector.load %arg8[%c0_97, %c0_98] : memref<32x32xbf16, #tpu.memory_space<vmem>>, vector<32x32xbf16>
    %cst_99 = arith.constant dense<0.000000e+00> : vector<128x32xf32>
    %126 = tpu.matmul %124, %125, %cst_99 {dimension_numbers = #tpu.dot_dimension_numbers<[1], [0], [0], [1], [0, 0, 1, 1], [], []>} : vector<128x32xbf16>, vector<32x32xbf16>, vector<128x32xf32> -> vector<128x32xf32>
    %c0_100 = arith.constant 0 : index
    %c0_101 = arith.constant 0 : index
    %127 = vector.load %arg9[%c0_100, %c0_101] : memref<1x32xf32, #tpu.memory_space<vmem>>, vector<1x32xf32>
    %c0_102 = arith.constant 0 : index
    %c0_103 = arith.constant 0 : index
    %128 = vector.load %arg10[%c0_102, %c0_103] : memref<1x32xf32, #tpu.memory_space<vmem>>, vector<1x32xf32>
    %cst_104 = arith.constant dense<0.000000e+00> : vector<32xf32>
    %129 = vector.multi_reduction <add>, %126, %cst_104 [0] : vector<128x32xf32> to vector<32xf32>
    %130 = vector.shape_cast %129 : vector<32xf32> to vector<1x32xf32>
    %cst_105 = arith.constant 1.280000e+02 : f32
    %131 = vector.broadcast %cst_105 : f32 to vector<1x32xf32>
    %132 = arith.divf %130, %131 : vector<1x32xf32>
    %133 = vector.broadcast %132 : vector<1x32xf32> to vector<128x32xf32>
    %134 = arith.subf %126, %133 : vector<128x32xf32>
    %135 = arith.mulf %134, %134 : vector<128x32xf32>
    %cst_106 = arith.constant dense<0.000000e+00> : vector<32xf32>
    %136 = vector.multi_reduction <add>, %135, %cst_106 [0] : vector<128x32xf32> to vector<32xf32>
    %137 = vector.shape_cast %136 : vector<32xf32> to vector<1x32xf32>
    %cst_107 = arith.constant 1.280000e+02 : f32
    %138 = vector.broadcast %cst_107 : f32 to vector<1x32xf32>
    %139 = arith.divf %137, %138 : vector<1x32xf32>
    %140 = vector.broadcast %132 : vector<1x32xf32> to vector<128x32xf32>
    %141 = arith.subf %126, %140 : vector<128x32xf32>
    %cst_108 = arith.constant 9.99999974E-6 : f32
    %142 = vector.broadcast %cst_108 : f32 to vector<1x32xf32>
    %143 = arith.addf %139, %142 : vector<1x32xf32>
    %144 = math.rsqrt %143 : vector<1x32xf32>
    %145 = vector.broadcast %144 : vector<1x32xf32> to vector<128x32xf32>
    %146 = arith.mulf %141, %145 : vector<128x32xf32>
    %147 = vector.broadcast %127 : vector<1x32xf32> to vector<128x32xf32>
    %148 = arith.mulf %146, %147 : vector<128x32xf32>
    %149 = vector.broadcast %128 : vector<1x32xf32> to vector<128x32xf32>
    %150 = arith.addf %148, %149 : vector<128x32xf32>
    %151 = arith.addf %150, %0 : vector<128x32xf32>
    %cst_109 = arith.constant 0.000000e+00 : f32
    %152 = vector.broadcast %cst_109 : f32 to vector<128x32xf32>
    %153 = arith.maximumf %151, %152 : vector<128x32xf32>
    %c0_110 = arith.constant 0 : index
    %c0_111 = arith.constant 0 : index
    %154 = vector.load %arg11[%c0_110, %c0_111] : memref<128x32xf32, #tpu.memory_space<vmem>>, vector<128x32xf32>
    tpu.vector_store %arg11[%c0_110, %c0_111], %153 {strides = array<i32>} : memref<128x32xf32, #tpu.memory_space<vmem>>, vector<128x32xf32>,
    return
  }
  func.func @transform_0(%arg0: i32) -> (i32, i32) {
    %c0_i32 = arith.constant 0 : i32
    %c0_i32_0 = arith.constant 0 : i32
    %c0_i32_1 = arith.constant 0 : i32
    return %c0_i32, %c0_i32_0 : i32, i32
  }
  func.func @transform_1(%arg0: i32) -> (i32, i32) {
    %c0_i32 = arith.constant 0 : i32
    %c0_i32_0 = arith.constant 0 : i32
    %c0_i32_1 = arith.constant 0 : i32
    return %c0_i32, %c0_i32_0 : i32, i32
  }
  func.func @transform_2(%arg0: i32) -> (i32, i32) {
    %c0_i32 = arith.constant 0 : i32
    %c0_i32_0 = arith.constant 0 : i32
    %c0_i32_1 = arith.constant 0 : i32
    return %c0_i32, %c0_i32_0 : i32, i32
  }
  func.func @transform_3(%arg0: i32) -> (i32, i32) {
    %c0_i32 = arith.constant 0 : i32
    %c0_i32_0 = arith.constant 0 : i32
    %c0_i32_1 = arith.constant 0 : i32
    return %c0_i32, %c0_i32_0 : i32, i32
  }
  func.func @transform_4(%arg0: i32) -> (i32, i32, i32) {
    %c0_i32 = arith.constant 0 : i32
    %c0_i32_0 = arith.constant 0 : i32
    %c0_i32_1 = arith.constant 0 : i32
    %c0_i32_2 = arith.constant 0 : i32
    return %c0_i32, %c0_i32_0, %c0_i32_1 : i32, i32, i32
  }
  func.func @transform_5(%arg0: i32) -> (i32, i32) {
    %c0_i32 = arith.constant 0 : i32
    %c0_i32_0 = arith.constant 0 : i32
    %c0_i32_1 = arith.constant 0 : i32
    return %c0_i32, %c0_i32_0 : i32, i32
  }
  func.func @transform_6(%arg0: i32) -> (i32, i32) {
    %c0_i32 = arith.constant 0 : i32
    %c0_i32_0 = arith.constant 0 : i32
    %c0_i32_1 = arith.constant 0 : i32
    return %c0_i32, %c0_i32_0 : i32, i32
  }
  func.func @transform_7(%arg0: i32) -> (i32, i32) {
    %c0_i32 = arith.constant 0 : i32
    %c0_i32_0 = arith.constant 0 : i32
    %c0_i32_1 = arith.constant 0 : i32
    return %c0_i32, %c0_i32_0 : i32, i32
  }
  func.func @transform_8(%arg0: i32) -> (i32, i32) {
    %c0_i32 = arith.constant 0 : i32
    %c0_i32_0 = arith.constant 0 : i32
    %c0_i32_1 = arith.constant 0 : i32
    return %c0_i32, %c0_i32_0 : i32, i32
  }
  func.func @transform_9(%arg0: i32) -> (i32, i32) {
    %c0_i32 = arith.constant 0 : i32
    %c0_i32_0 = arith.constant 0 : i32
    %c0_i32_1 = arith.constant 0 : i32
    return %c0_i32, %c0_i32_0 : i32, i32
  }
  func.func @transform_10(%arg0: i32) -> (i32, i32) {
    %c0_i32 = arith.constant 0 : i32
    %c0_i32_0 = arith.constant 0 : i32
    %c0_i32_1 = arith.constant 0 : i32
    return %c0_i32, %c0_i32_0 : i32, i32
  }
}

</mosaic_0001>

<llo_original>
// kernel: _forward.1
$region0: #{_forward.1}
  #allocation0 [shape = 'u32[]', space=smem, size = 0x4, offset = 0x4, fixed_abs, tag = 'smem constant byte address 0x4 - core index']
  #allocation1 [shape = 'u32[144,128]{1,0:T(1,128)}', space=vmem, size = 0x12000, scoped, tag = 'internal scratch']
  #allocation2 [shape = 'f32[2,10,10,32]{3,2,1,0:T(8,128)}', space=vmem, size = 0x28000, scoped, tag = 'scratch operand']
  %s0 = inlined_call_operand.hbm [shape: f32[128,32], index: 0, kind: input, shape index: {}]
  %s1 = inlined_call_operand.hbm [shape: bf16[32,32], index: 1, kind: input, shape index: {}]
  %s2 = inlined_call_operand.vmem [shape: f32[1,32], index: 2, kind: input, shape index: {}]
  %s3 = inlined_call_operand.vmem [shape: f32[1,32], index: 3, kind: input, shape index: {}]
  %s4 = inlined_call_operand.hbm [shape: bf16[9,32,32], index: 4, kind: input, shape index: {}]
  %s5 = inlined_call_operand.vmem [shape: f32[1,32], index: 5, kind: input, shape index: {}]
  %s6 = inlined_call_operand.vmem [shape: f32[1,32], index: 6, kind: input, shape index: {}]
  %s7 = inlined_call_operand.vmem [shape: bf16[32,32], index: 7, kind: input, shape index: {}]
  %s8 = inlined_call_operand.vmem [shape: f32[1,32], index: 8, kind: input, shape index: {}]
  %s9 = inlined_call_operand.vmem [shape: f32[1,32], index: 9, kind: input, shape index: {}]
  %s10 = inlined_call_operand.hbm [shape: f32[128,32], index: 10, kind: output, shape index: {}]
  %s11 = sld [smem:[#allocation0]]
  $region62: #{_forward.1} parent=0
    _
  %s13 = ssub.s32 1, %s11
  %s14 = scalar_select 0, %s13, %s11
  $region1: #{_forward.1} parent=0
    #allocation3 [shape = 'u8[65536]{0}', space=vmem, size = 0x10000, scoped, tag = 'input window, operand 0, single buffered']
    #allocation4 [shape = 's32[1]{0}', space=sflag, size = 0x4, scoped, tag = 'scoped memory for _forward.1']
    #allocation5 [shape = 's32[1]{0}', space=sflag, size = 0x4, scoped, tag = 'scoped memory for _forward.1']
    #allocation6 [shape = 'u8[8192]{0}', space=vmem, size = 0x2000, scoped, tag = 'input window, operand 1, single buffered']
    #allocation7 [shape = 's32[1]{0}', space=sflag, size = 0x4, scoped, tag = 'scoped memory for _forward.1']
    #allocation8 [shape = 'u8[73728]{0}', space=vmem, size = 0x12000, scoped, tag = 'input window, operand 4, single buffered']
    #allocation9 [shape = 'u8[65536]{0}', space=vmem, size = 0x10000, scoped, tag = 'output window, operand 0, single buffered']
    %15 = vsyncpa [#allocation4], 0
    %16 = vsyncpa [#allocation7], 0
    %17 = vsyncpa [#allocation5], 0
    // Predicated region
    $region2: #{_forward.1} parent=1 // pred_check
      _
    $region3: #{_forward.1} parent=1 // pred_check_branch
      %19 = sbr.rel (0) target = $region5
    $region4: #{_forward.1} parent=1 // pred_region
      %s21 = ssub.s32 2048, 2048
      %22 = vsyncadd [#allocation4], %s21
      %s23 = sshll.u32 [#allocation3], 4
      %s24 = int_to_ptr.vmem [resolvable:$true] %s23
      %29 = dma.hbm_to_vmem [thread:$0]  %s0, 2048, %s24, [#allocation4], 128, 128, 8
    $region5: #{_forward.1} parent=1 // pred_fallthru
      _
    // Predicated region
    $region6: #{_forward.1} parent=1 // pred_check
      _
    $region7: #{_forward.1} parent=1 // pred_check_branch
      %31 = sbr.rel (0) target = $region9
    $region8: #{_forward.1} parent=1 // pred_region
      %s33 = ssub.s32 256, 256
      %34 = vsyncadd [#allocation7], %s33
      %s35 = sshll.u32 [#allocation6], 4
      %s36 = int_to_ptr.vmem [resolvable:$true] %s35
      %41 = dma.hbm_to_vmem [thread:$0]  %s1, 256, %s36, [#allocation7], 64, 64, 4
    $region9: #{_forward.1} parent=1 // pred_fallthru
      _
    // Predicated region
    $region10: #{_forward.1} parent=1 // pred_check
      _
    $region11: #{_forward.1} parent=1 // pred_check_branch
      %43 = sbr.rel (0) target = $region13
    $region12: #{_forward.1} parent=1 // pred_region
      _
    $region13: #{_forward.1} parent=1 // pred_fallthru
      _
    // Predicated region
    $region14: #{_forward.1} parent=1 // pred_check
      _
    $region15: #{_forward.1} parent=1 // pred_check_branch
      %45 = sbr.rel (0) target = $region17
    $region16: #{_forward.1} parent=1 // pred_region
      _
    $region17: #{_forward.1} parent=1 // pred_fallthru
      _
    // Predicated region
    $region18: #{_forward.1} parent=1 // pred_check
      _
    $region19: #{_forward.1} parent=1 // pred_check_branch
      %47 = sbr.rel (0) target = $region21
    $region20: #{_forward.1} parent=1 // pred_region
      %s49 = ssub.s32 2304, 2304
      %50 = vsyncadd [#allocation7], %s49
      %s51 = sshll.u32 [#allocation8], 4
      %s52 = int_to_ptr.vmem [resolvable:$true] %s51
      %57 = dma.hbm_to_vmem [thread:$0]  %s4, 2304, %s52, [#allocation7], 64, 64, 4
    $region21: #{_forward.1} parent=1 // pred_fallthru
      _
    // Predicated region
    $region22: #{_forward.1} parent=1 // pred_check
      _
    $region23: #{_forward.1} parent=1 // pred_check_branch
      %59 = sbr.rel (0) target = $region25
    $region24: #{_forward.1} parent=1 // pred_region
      _
    $region25: #{_forward.1} parent=1 // pred_fallthru
      _
    // Predicated region
    $region26: #{_forward.1} parent=1 // pred_check
      _
    $region27: #{_forward.1} parent=1 // pred_check_branch
      %61 = sbr.rel (0) target = $region29
    $region28: #{_forward.1} parent=1 // pred_region
      _
    $region29: #{_forward.1} parent=1 // pred_fallthru
      _
    // Predicated region
    $region30: #{_forward.1} parent=1 // pred_check
      _
    $region31: #{_forward.1} parent=1 // pred_check_branch
      %63 = sbr.rel (0) target = $region33
    $region32: #{_forward.1} parent=1 // pred_region
      _
    $region33: #{_forward.1} parent=1 // pred_fallthru
      _
    // Predicated region
    $region34: #{_forward.1} parent=1 // pred_check
      _
    $region35: #{_forward.1} parent=1 // pred_check_branch
      %65 = sbr.rel (0) target = $region37
    $region36: #{_forward.1} parent=1 // pred_region
      _
    $region37: #{_forward.1} parent=1 // pred_fallthru
      _
    // Predicated region
    $region38: #{_forward.1} parent=1 // pred_check
      _
    $region39: #{_forward.1} parent=1 // pred_check_branch
      %67 = sbr.rel (0) target = $region41
    $region40: #{_forward.1} parent=1 // pred_region
      _
    $region41: #{_forward.1} parent=1 // pred_fallthru
      _
    // Predicated region
    $region42: #{_forward.1} parent=1 // pred_check
      _
    $region43: #{_forward.1} parent=1 // pred_check_branch
      %69 = sbr.rel (0) target = $region45
    $region44: #{_forward.1} parent=1 // pred_region
      %70 = dma.done [#allocation4], 2048
    $region45: #{_forward.1} parent=1 // pred_fallthru
      _
    // Predicated region
    $region46: #{_forward.1} parent=1 // pred_check
      _
    $region47: #{_forward.1} parent=1 // pred_check_branch
      %72 = sbr.rel (0) target = $region49
    $region48: #{_forward.1} parent=1 // pred_region
      %73 = dma.done [#allocation7], 256
    $region49: #{_forward.1} parent=1 // pred_fallthru
      _
    // Predicated region
    $region50: #{_forward.1} parent=1 // pred_check
      _
    $region51: #{_forward.1} parent=1 // pred_check_branch
      %75 = sbr.rel (0) target = $region53
    $region52: #{_forward.1} parent=1 // pred_region
      %76 = dma.done [#allocation7], 2304
    $region53: #{_forward.1} parent=1 // pred_fallthru
      _
    %v78 = vld [vmem:[#allocation3] sm:$0xff]
    %v79 = vld [vmem:[#allocation3 + $0x8] sm:$0xff]
    %v80 = vld [vmem:[#allocation3 + $0x10] sm:$0xff]
    %v81 = vld [vmem:[#allocation3 + $0x18] sm:$0xff]
    %v82 = vld [vmem:[#allocation3 + $0x20] sm:$0xff]
    %v83 = vld [vmem:[#allocation3 + $0x28] sm:$0xff]
    %v84 = vld [vmem:[#allocation3 + $0x30] sm:$0xff]
    %v85 = vld [vmem:[#allocation3 + $0x38] sm:$0xff]
    %v86 = vld [vmem:[#allocation3 + $0x40] sm:$0xff]
    %v87 = vld [vmem:[#allocation3 + $0x48] sm:$0xff]
    %v88 = vld [vmem:[#allocation3 + $0x50] sm:$0xff]
    %v89 = vld [vmem:[#allocation3 + $0x58] sm:$0xff]
    %v90 = vld [vmem:[#allocation3 + $0x60] sm:$0xff]
    %v91 = vld [vmem:[#allocation3 + $0x68] sm:$0xff]
    %v92 = vld [vmem:[#allocation3 + $0x70] sm:$0xff]
    %v93 = vld [vmem:[#allocation3 + $0x78] sm:$0xff]
    %v94 = vpack.c.bf16 %v79, %v78
    %v95 = vpack.c.bf16 %v81, %v80
    %v96 = vpack.c.bf16 %v83, %v82
    %v97 = vpack.c.bf16 %v85, %v84
    %v98 = vpack.c.bf16 %v87, %v86
    %v99 = vpack.c.bf16 %v89, %v88
    %v100 = vpack.c.bf16 %v91, %v90
    %v101 = vpack.c.bf16 %v93, %v92
    %v102 = vld [vmem:[#allocation6] sm:$0xf]
    %v103 = vld [vmem:[#allocation6 + $0x4] sm:$0xf]
    %v104 = vld [vmem:[#allocation6 + $0x8] sm:$0xf]
    %v105 = vld [vmem:[#allocation6 + $0xc] sm:$0xf]
    %v110 = vunpack.c.l.b16 %v102
    %v111 = vunpack.c.l.b16 %v103
    %v112 = vunpack.c.l.b16 %v104
    %v113 = vunpack.c.l.b16 %v105
    %v114 = vpack.c.b16 %v111, %v110
    %v115 = vpack.c.b16 %v113, %v112
    %vm118 = vcmask 261120
    %v120 = vsel %vm118, %v94, 0
    %v123 = vsel %vm118, %v95, 0
    %v126 = vsel %vm118, %v96, 0
    %v129 = vsel %vm118, %v97, 0
    %v132 = vsel %vm118, %v98, 0
    %v135 = vsel %vm118, %v99, 0
    %v138 = vsel %vm118, %v100, 0
    %v141 = vsel %vm118, %v101, 0
    %143 = vmatprep.subr.bf16.mxu0 0
    %144 = vmatpush1.bf16.msra.mxu0 %v114
    %145 = vmatprep.subr.bf16.mxu0 0
    %146 = vmatpush1.bf16.msra.mxu0 %v115
    %147 = vmatprep.subr.bf16.mxu0 0
    %148 = vmatpush1.bf16.msra.mxu0 0
    %149 = vmatprep.subr.bf16.mxu0 0
    %150 = vmatpush1.bf16.msra.mxu0 0
    %151 = vmatprep.subr.bf16.mxu0 0
    %152 = vmatpush1.bf16.msra.mxu0 0
    %153 = vmatprep.subr.bf16.mxu0 0
    %154 = vmatpush1.bf16.msra.mxu0 0
    %155 = vmatprep.subr.bf16.mxu0 0
    %156 = vmatpush1.bf16.msra.mxu0 0
    %157 = vmatprep.subr.bf16.mxu0 0
    %158 = vmatpush1.bf16.msra.mxu0 0
    %159 = vmatprep.subr.bf16.mxu0 0
    %160 = vmatpush1.bf16.msra.mxu0 0
    %161 = vmatprep.subr.bf16.mxu0 0
    %162 = vmatpush1.bf16.msra.mxu0 0
    %163 = vmatprep.subr.bf16.mxu0 0
    %164 = vmatpush1.bf16.msra.mxu0 0
    %165 = vmatprep.subr.bf16.mxu0 0
    %166 = vmatpush1.bf16.msra.mxu0 0
    %167 = vmatprep.subr.bf16.mxu0 0
    %168 = vmatpush1.bf16.msra.mxu0 0
    %169 = vmatprep.subr.bf16.mxu0 0
    %170 = vmatpush1.bf16.msra.mxu0 0
    %171 = vmatprep.subr.bf16.mxu0 0
    %172 = vmatpush1.bf16.msra.mxu0 0
    %173 = vmatprep.subr.bf16.mxu0 0
    %174 = vmatpush1.bf16.msra.mxu0 0
    %175 = vmatprep.mubr.bf16.mxu0 0
    %176 = vmatmul.mubr.bf16.gmra.mrb[0].mxu0 %v120
    %v177 = vpop.f32.mrb[0].mxu0
    %v178 = vadd.f32 0.0, %v177
    %v179 = vpop.f32.mrb[0].mxu0
    %v180 = vpop.f32.mrb[0].mxu0
    %v181 = vadd.f32 0.0, %v180
    %v182 = vpop.f32.mrb[0].mxu0
    %183 = vmatprep.mubr.bf16.mxu0 0
    %184 = vmatmul.mubr.bf16.gmra.mrb[0].mxu0 %v123
    %v185 = vpop.f32.mrb[0].mxu0
    %v186 = vadd.f32 0.0, %v185
    %v187 = vpop.f32.mrb[0].mxu0
    %v188 = vpop.f32.mrb[0].mxu0
    %v189 = vadd.f32 0.0, %v188
    %v190 = vpop.f32.mrb[0].mxu0
    %191 = vmatprep.mubr.bf16.mxu0 0
    %192 = vmatmul.mubr.bf16.gmra.mrb[0].mxu0 %v126
    %v193 = vpop.f32.mrb[0].mxu0
    %v194 = vadd.f32 0.0, %v193
    %v195 = vpop.f32.mrb[0].mxu0
    %v196 = vpop.f32.mrb[0].mxu0
    %v197 = vadd.f32 0.0, %v196
    %v198 = vpop.f32.mrb[0].mxu0
    %199 = vmatprep.mubr.bf16.mxu0 0
    %200 = vmatmul.mubr.bf16.gmra.mrb[0].mxu0 %v129
    %v201 = vpop.f32.mrb[0].mxu0
    %v202 = vadd.f32 0.0, %v201
    %v203 = vpop.f32.mrb[0].mxu0
    %v204 = vpop.f32.mrb[0].mxu0
    %v205 = vadd.f32 0.0, %v204
    %v206 = vpop.f32.mrb[0].mxu0
    %207 = vmatprep.mubr.bf16.mxu0 0
    %208 = vmatmul.mubr.bf16.gmra.mrb[0].mxu0 %v132
    %v209 = vpop.f32.mrb[0].mxu0
    %v210 = vadd.f32 0.0, %v209
    %v211 = vpop.f32.mrb[0].mxu0
    %v212 = vpop.f32.mrb[0].mxu0
    %v213 = vadd.f32 0.0, %v212
    %v214 = vpop.f32.mrb[0].mxu0
    %215 = vmatprep.mubr.bf16.mxu0 0
    %216 = vmatmul.mubr.bf16.gmra.mrb[0].mxu0 %v135
    %v217 = vpop.f32.mrb[0].mxu0
    %v218 = vadd.f32 0.0, %v217
    %v219 = vpop.f32.mrb[0].mxu0
    %v220 = vpop.f32.mrb[0].mxu0
    %v221 = vadd.f32 0.0, %v220
    %v222 = vpop.f32.mrb[0].mxu0
    %223 = vmatprep.mubr.bf16.mxu0 0
    %224 = vmatmul.mubr.bf16.gmra.mrb[0].mxu0 %v138
    %v225 = vpop.f32.mrb[0].mxu0
    %v226 = vadd.f32 0.0, %v225
    %v227 = vpop.f32.mrb[0].mxu0
    %v228 = vpop.f32.mrb[0].mxu0
    %v229 = vadd.f32 0.0, %v228
    %v230 = vpop.f32.mrb[0].mxu0
    %231 = vmatprep.mubr.bf16.mxu0 0
    %232 = vmatmul.mubr.bf16.gmra.mrb[0].mxu0 %v141
    %v233 = vpop.f32.mrb[0].mxu0
    %v234 = vadd.f32 0.0, %v233
    %v235 = vpop.f32.mrb[0].mxu0
    %v236 = vpop.f32.mrb[0].mxu0
    %v237 = vadd.f32 0.0, %v236
    %v238 = vpop.f32.mrb[0].mxu0
    %239 = vdwg.mxu0
    %v240 = vld [vmem:[%s2] sm:$0x1]
    %v241 = vld [vmem:[%s3] sm:$0x1]
    %v242 = vsel %vm118, %v178, 0.0
    %v243 = vsel %vm118, %v181, 0.0
    %v244 = vadd.f32 %v242, %v243
    %v245 = vsel %vm118, %v186, 0.0
    %v246 = vadd.f32 %v244, %v245
    %v247 = vsel %vm118, %v189, 0.0
    %v248 = vadd.f32 %v246, %v247
    %v249 = vsel %vm118, %v194, 0.0
    %v250 = vadd.f32 %v248, %v249
    %v251 = vsel %vm118, %v197, 0.0
    %v252 = vadd.f32 %v250, %v251
    %v253 = vsel %vm118, %v202, 0.0
    %v254 = vadd.f32 %v252, %v253
    %v255 = vsel %vm118, %v205, 0.0
    %v256 = vadd.f32 %v254, %v255
    %v257 = vsel %vm118, %v210, 0.0
    %v258 = vadd.f32 %v256, %v257
    %v259 = vsel %vm118, %v213, 0.0
    %v260 = vadd.f32 %v258, %v259
    %v261 = vsel %vm118, %v218, 0.0
    %v262 = vadd.f32 %v260, %v261
    %v263 = vsel %vm118, %v221, 0.0
    %v264 = vadd.f32 %v262, %v263
    %v265 = vsel %vm118, %v226, 0.0
    %v266 = vadd.f32 %v264, %v265
    %v267 = vsel %vm118, %v229, 0.0
    %v268 = vadd.f32 %v266, %v267
    %v269 = vsel %vm118, %v234, 0.0
    %v270 = vadd.f32 %v268, %v269
    %v271 = vsel %vm118, %v237, 0.0
    %v272 = vadd.f32 %v270, %v271
    %v273 = vrot.slane %v272, 4
    %v274 = vadd.f32 %v272, %v273
    %v275 = vrot.slane %v274, 2
    %v276 = vadd.f32 %v274, %v275
    %v277 = vrot.slane %v276, 1
    %v278 = vadd.f32 %v276, %v277
    %v279 = vrcp.pop 128.0
    %v280 = vmul.f32 %v278, %v279
    %v281 = vsub.f32 %v178, %v280
    %v282 = vsub.f32 %v181, %v280
    %v283 = vsub.f32 %v186, %v280
    %v284 = vsub.f32 %v189, %v280
    %v285 = vsub.f32 %v194, %v280
    %v286 = vsub.f32 %v197, %v280
    %v287 = vsub.f32 %v202, %v280
    %v288 = vsub.f32 %v205, %v280
    %v289 = vsub.f32 %v210, %v280
    %v290 = vsub.f32 %v213, %v280
    %v291 = vsub.f32 %v218, %v280
    %v292 = vsub.f32 %v221, %v280
    %v293 = vsub.f32 %v226, %v280
    %v294 = vsub.f32 %v229, %v280
    %v295 = vsub.f32 %v234, %v280
    %v296 = vsub.f32 %v237, %v280
    %v297 = vmul.f32 %v281, %v281
    %v298 = vmul.f32 %v282, %v282
    %v299 = vmul.f32 %v283, %v283
    %v300 = vmul.f32 %v284, %v284
    %v301 = vmul.f32 %v285, %v285
    %v302 = vmul.f32 %v286, %v286
    %v303 = vmul.f32 %v287, %v287
    %v304 = vmul.f32 %v288, %v288
    %v305 = vmul.f32 %v289, %v289
    %v306 = vmul.f32 %v290, %v290
    %v307 = vmul.f32 %v291, %v291
    %v308 = vmul.f32 %v292, %v292
    %v309 = vmul.f32 %v293, %v293
    %v310 = vmul.f32 %v294, %v294
    %v311 = vmul.f32 %v295, %v295
    %v312 = vmul.f32 %v296, %v296
    %v313 = vsel %vm118, %v297, 0.0
    %v314 = vsel %vm118, %v298, 0.0
    %v315 = vadd.f32 %v313, %v314
    %v316 = vsel %vm118, %v299, 0.0
    %v317 = vadd.f32 %v315, %v316
    %v318 = vsel %vm118, %v300, 0.0
    %v319 = vadd.f32 %v317, %v318
    %v320 = vsel %vm118, %v301, 0.0
    %v321 = vadd.f32 %v319, %v320
    %v322 = vsel %vm118, %v302, 0.0
    %v323 = vadd.f32 %v321, %v322
    %v324 = vsel %vm118, %v303, 0.0
    %v325 = vadd.f32 %v323, %v324
    %v326 = vsel %vm118, %v304, 0.0
    %v327 = vadd.f32 %v325, %v326
    %v328 = vsel %vm118, %v305, 0.0
    %v329 = vadd.f32 %v327, %v328
    %v330 = vsel %vm118, %v306, 0.0
    %v331 = vadd.f32 %v329, %v330
    %v332 = vsel %vm118, %v307, 0.0
    %v333 = vadd.f32 %v331, %v332
    %v334 = vsel %vm118, %v308, 0.0
    %v335 = vadd.f32 %v333, %v334
    %v336 = vsel %vm118, %v309, 0.0
    %v337 = vadd.f32 %v335, %v336
    %v338 = vsel %vm118, %v310, 0.0
    %v339 = vadd.f32 %v337, %v338
    %v340 = vsel %vm118, %v311, 0.0
    %v341 = vadd.f32 %v339, %v340
    %v342 = vsel %vm118, %v312, 0.0
    %v343 = vadd.f32 %v341, %v342
    %v344 = vrot.slane %v343, 4
    %v345 = vadd.f32 %v343, %v344
    %v346 = vrot.slane %v345, 2
    %v347 = vadd.f32 %v345, %v346
    %v348 = vrot.slane %v347, 1
    %v349 = vadd.f32 %v347, %v348
    %v350 = vmul.f32 %v349, %v279
    %v351 = vadd.f32 %v350, 1e-05
    %v352 = vrsqrt.pop %v351
    %v353 = vmul.f32 %v281, %v352
    %v354 = vmul.f32 %v282, %v352
    %v355 = vmul.f32 %v283, %v352
    %v356 = vmul.f32 %v284, %v352
    %v357 = vmul.f32 %v285, %v352
    %v358 = vmul.f32 %v286, %v352
    %v359 = vmul.f32 %v287, %v352
    %v360 = vmul.f32 %v288, %v352
    %v361 = vmul.f32 %v289, %v352
    %v362 = vmul.f32 %v290, %v352
    %v363 = vmul.f32 %v291, %v352
    %v364 = vmul.f32 %v292, %v352
    %v365 = vmul.f32 %v293, %v352
    %v366 = vmul.f32 %v294, %v352
    %v367 = vmul.f32 %v295, %v352
    %v368 = vmul.f32 %v296, %v352
    %v370 = vlaneseq
    %v371 = vshrl.u32 %v370, 7
    %v372 = vsub.s32 0, %v371
    %v373 = vrot.slane %v240, %v372
    %v375 = vmul.f32 %v353, %v373
    %v376 = vmul.f32 %v354, %v373
    %v377 = vmul.f32 %v355, %v373
    %v378 = vmul.f32 %v356, %v373
    %v379 = vmul.f32 %v357, %v373
    %v380 = vmul.f32 %v358, %v373
    %v381 = vmul.f32 %v359, %v373
    %v382 = vmul.f32 %v360, %v373
    %v383 = vmul.f32 %v361, %v373
    %v384 = vmul.f32 %v362, %v373
    %v385 = vmul.f32 %v363, %v373
    %v386 = vmul.f32 %v364, %v373
    %v387 = vmul.f32 %v365, %v373
    %v388 = vmul.f32 %v366, %v373
    %v389 = vmul.f32 %v367, %v373
    %v390 = vmul.f32 %v368, %v373
    %v392 = vlaneseq
    %v393 = vshrl.u32 %v392, 7
    %v394 = vsub.s32 0, %v393
    %v395 = vrot.slane %v241, %v394
    %v397 = vadd.f32 %v375, %v395
    %v398 = vadd.f32 %v376, %v395
    %v399 = vadd.f32 %v377, %v395
    %v400 = vadd.f32 %v378, %v395
    %v401 = vadd.f32 %v379, %v395
    %v402 = vadd.f32 %v380, %v395
    %v403 = vadd.f32 %v381, %v395
    %v404 = vadd.f32 %v382, %v395
    %v405 = vadd.f32 %v383, %v395
    %v406 = vadd.f32 %v384, %v395
    %v407 = vadd.f32 %v385, %v395
    %v408 = vadd.f32 %v386, %v395
    %v409 = vadd.f32 %v387, %v395
    %v410 = vadd.f32 %v388, %v395
    %v411 = vadd.f32 %v389, %v395
    %v412 = vadd.f32 %v390, %v395
    %v413 = vmax.f32 %v397, 0.0
    %v414 = vmax.f32 %v398, 0.0
    %v415 = vmax.f32 %v399, 0.0
    %v416 = vmax.f32 %v400, 0.0
    %v417 = vmax.f32 %v401, 0.0
    %v418 = vmax.f32 %v402, 0.0
    %v419 = vmax.f32 %v403, 0.0
    %v420 = vmax.f32 %v404, 0.0
    %v421 = vmax.f32 %v405, 0.0
    %v422 = vmax.f32 %v406, 0.0
    %v423 = vmax.f32 %v407, 0.0
    %v424 = vmax.f32 %v408, 0.0
    %v425 = vmax.f32 %v409, 0.0
    %v426 = vmax.f32 %v410, 0.0
    %v427 = vmax.f32 %v411, 0.0
    %v428 = vmax.f32 %v412, 0.0
    %429 = vst.msk [vmem:[#allocation2] sm:$0xff] %vm118, 0.0
    %vm430 = vcmask 254976
    %431 = vst.msk [vmem:[#allocation2 + $0x8] sm:$0x3] %vm430, 0.0
    %432 = vst.msk [vmem:[#allocation2 + $0x10] sm:$0xff] %vm118, 0.0
    %433 = vst.msk [vmem:[#allocation2 + $0x18] sm:$0x3] %vm430, 0.0
    %434 = vst.msk [vmem:[#allocation2 + $0x20] sm:$0xff] %vm118, 0.0
    %435 = vst.msk [vmem:[#allocation2 + $0x28] sm:$0x3] %vm430, 0.0
    %436 = vst.msk [vmem:[#allocation2 + $0x30] sm:$0xff] %vm118, 0.0
    %437 = vst.msk [vmem:[#allocation2 + $0x38] sm:$0x3] %vm430, 0.0
    %438 = vst.msk [vmem:[#allocation2 + $0x40] sm:$0xff] %vm118, 0.0
    %439 = vst.msk [vmem:[#allocation2 + $0x48] sm:$0x3] %vm430, 0.0
    %440 = vst.msk [vmem:[#allocation2 + $0x50] sm:$0xff] %vm118, 0.0
    %441 = vst.msk [vmem:[#allocation2 + $0x58] sm:$0x3] %vm430, 0.0
    %442 = vst.msk [vmem:[#allocation2 + $0x60] sm:$0xff] %vm118, 0.0
    %443 = vst.msk [vmem:[#allocation2 + $0x68] sm:$0x3] %vm430, 0.0
    %444 = vst.msk [vmem:[#allocation2 + $0x70] sm:$0xff] %vm118, 0.0
    %445 = vst.msk [vmem:[#allocation2 + $0x78] sm:$0x3] %vm430, 0.0
    %446 = vst.msk [vmem:[#allocation2 + $0x80] sm:$0xff] %vm118, 0.0
    %447 = vst.msk [vmem:[#allocation2 + $0x88] sm:$0x3] %vm430, 0.0
    %448 = vst.msk [vmem:[#allocation2 + $0x90] sm:$0xff] %vm118, 0.0
    %449 = vst.msk [vmem:[#allocation2 + $0x98] sm:$0x3] %vm430, 0.0
    %450 = vst.msk [vmem:[#allocation2 + $0xa0] sm:$0xff] %vm118, 0.0
    %451 = vst.msk [vmem:[#allocation2 + $0xa8] sm:$0x3] %vm430, 0.0
    %452 = vst.msk [vmem:[#allocation2 + $0xb0] sm:$0xff] %vm118, 0.0
    %453 = vst.msk [vmem:[#allocation2 + $0xb8] sm:$0x3] %vm430, 0.0
    %454 = vst.msk [vmem:[#allocation2 + $0xc0] sm:$0xff] %vm118, 0.0
    %455 = vst.msk [vmem:[#allocation2 + $0xc8] sm:$0x3] %vm430, 0.0
    %456 = vst.msk [vmem:[#allocation2 + $0xd0] sm:$0xff] %vm118, 0.0
    %457 = vst.msk [vmem:[#allocation2 + $0xd8] sm:$0x3] %vm430, 0.0
    %458 = vst.msk [vmem:[#allocation2 + $0xe0] sm:$0xff] %vm118, 0.0
    %459 = vst.msk [vmem:[#allocation2 + $0xe8] sm:$0x3] %vm430, 0.0
    %460 = vst.msk [vmem:[#allocation2 + $0xf0] sm:$0xff] %vm118, 0.0
    %461 = vst.msk [vmem:[#allocation2 + $0xf8] sm:$0x3] %vm430, 0.0
    %462 = vst.msk [vmem:[#allocation2 + $0x100] sm:$0xff] %vm118, 0.0
    %463 = vst.msk [vmem:[#allocation2 + $0x108] sm:$0x3] %vm430, 0.0
    %464 = vst.msk [vmem:[#allocation2 + $0x110] sm:$0xff] %vm118, 0.0
    %465 = vst.msk [vmem:[#allocation2 + $0x118] sm:$0x3] %vm430, 0.0
    %466 = vst.msk [vmem:[#allocation2 + $0x120] sm:$0xff] %vm118, 0.0
    %467 = vst.msk [vmem:[#allocation2 + $0x128] sm:$0x3] %vm430, 0.0
    %468 = vst.msk [vmem:[#allocation2 + $0x130] sm:$0xff] %vm118, 0.0
    %469 = vst.msk [vmem:[#allocation2 + $0x138] sm:$0x3] %vm430, 0.0
    %s470 = scalar_lea.vmem [#allocation2], 16
    %471 = vst.msk [vmem:[%s470 + $0x1] sm:$0xff] %vm118, %v413
    %472 = vst.msk [vmem:[%s470 + $0x11] sm:$0xff] %vm118, %v414
    %473 = vst.msk [vmem:[%s470 + $0x21] sm:$0xff] %vm118, %v415
    %474 = vst.msk [vmem:[%s470 + $0x31] sm:$0xff] %vm118, %v416
    %475 = vst.msk [vmem:[%s470 + $0x41] sm:$0xff] %vm118, %v417
    %476 = vst.msk [vmem:[%s470 + $0x51] sm:$0xff] %vm118, %v418
    %477 = vst.msk [vmem:[%s470 + $0x61] sm:$0xff] %vm118, %v419
    %478 = vst.msk [vmem:[%s470 + $0x71] sm:$0xff] %vm118, %v420
    %479 = vst.msk [vmem:[%s470 + $0xa1] sm:$0xff] %vm118, %v421
    %480 = vst.msk [vmem:[%s470 + $0xb1] sm:$0xff] %vm118, %v422
    %481 = vst.msk [vmem:[%s470 + $0xc1] sm:$0xff] %vm118, %v423
    %482 = vst.msk [vmem:[%s470 + $0xd1] sm:$0xff] %vm118, %v424
    %483 = vst.msk [vmem:[%s470 + $0xe1] sm:$0xff] %vm118, %v425
    %484 = vst.msk [vmem:[%s470 + $0xf1] sm:$0xff] %vm118, %v426
    %485 = vst.msk [vmem:[%s470 + $0x101] sm:$0xff] %vm118, %v427
    %486 = vst.msk [vmem:[%s470 + $0x111] sm:$0xff] %vm118, %v428
    %v487 = vld [vmem:[#allocation2] sm:$0xff]
    %v488 = vld [vmem:[#allocation2 + $0x10] sm:$0xff]
    %v489 = vld [vmem:[#allocation2 + $0x20] sm:$0xff]
    %v490 = vld [vmem:[#allocation2 + $0x30] sm:$0xff]
    %v491 = vld [vmem:[#allocation2 + $0x40] sm:$0xff]
    %v492 = vld [vmem:[#allocation2 + $0x50] sm:$0xff]
    %v493 = vld [vmem:[#allocation2 + $0x60] sm:$0xff]
    %v494 = vld [vmem:[#allocation2 + $0x70] sm:$0xff]
    %v495 = vld [vmem:[#allocation2 + $0xa0] sm:$0xff]
    %v496 = vld [vmem:[#allocation2 + $0xb0] sm:$0xff]
    %v497 = vld [vmem:[#allocation2 + $0xc0] sm:$0xff]
    %v498 = vld [vmem:[#allocation2 + $0xd0] sm:$0xff]
    %v499 = vld [vmem:[#allocation2 + $0xe0] sm:$0xff]
    %v500 = vld [vmem:[#allocation2 + $0xf0] sm:$0xff]
    %v501 = vld [vmem:[#allocation2 + $0x100] sm:$0xff]
    %v502 = vld [vmem:[#allocation2 + $0x110] sm:$0xff]
    %v503 = vpack.c.bf16 %v488, %v487
    %v504 = vpack.c.bf16 %v490, %v489
    %v505 = vpack.c.bf16 %v492, %v491
    %v506 = vpack.c.bf16 %v494, %v493
    %v507 = vpack.c.bf16 %v496, %v495
    %v508 = vpack.c.bf16 %v498, %v497
    %v509 = vpack.c.bf16 %v500, %v499
    %v510 = vpack.c.bf16 %v502, %v501
    %v511 = vld [vmem:[#allocation8] sm:$0xf]
    %v512 = vld [vmem:[#allocation8 + $0x4] sm:$0xf]
    %v513 = vld [vmem:[#allocation8 + $0x8] sm:$0xf]
    %v514 = vld [vmem:[#allocation8 + $0xc] sm:$0xf]
    %v515 = vld [vmem:[#allocation2 + $0x1] sm:$0xff]
    %v516 = vld [vmem:[#allocation2 + $0x11] sm:$0xff]
    %v517 = vld [vmem:[#allocation2 + $0x21] sm:$0xff]
    %v518 = vld [vmem:[#allocation2 + $0x31] sm:$0xff]
    %v519 = vld [vmem:[#allocation2 + $0x41] sm:$0xff]
    %v520 = vld [vmem:[#allocation2 + $0x51] sm:$0xff]
    %v521 = vld [vmem:[#allocation2 + $0x61] sm:$0xff]
    %v522 = vld [vmem:[#allocation2 + $0x71] sm:$0xff]
    %v523 = vld [vmem:[#allocation2 + $0xa1] sm:$0xff]
    %v524 = vld [vmem:[#allocation2 + $0xb1] sm:$0xff]
    %v525 = vld [vmem:[#allocation2 + $0xc1] sm:$0xff]
    %v526 = vld [vmem:[#allocation2 + $0xd1] sm:$0xff]
    %v527 = vld [vmem:[#allocation2 + $0xe1] sm:$0xff]
    %v528 = vld [vmem:[#allocation2 + $0xf1] sm:$0xff]
    %v529 = vld [vmem:[#allocation2 + $0x101] sm:$0xff]
    %v530 = vld [vmem:[#allocation2 + $0x111] sm:$0xff]
    %v531 = vpack.c.bf16 %v516, %v515
    %v532 = vpack.c.bf16 %v518, %v517
    %v533 = vpack.c.bf16 %v520, %v519
    %v534 = vpack.c.bf16 %v522, %v521
    %v535 = vpack.c.bf16 %v524, %v523
    %v536 = vpack.c.bf16 %v526, %v525
    %v537 = vpack.c.bf16 %v528, %v527
    %v538 = vpack.c.bf16 %v530, %v529
    %s539 = scalar_lea.vmem [#allocation8], 16
    %v540 = vld [vmem:[%s539] sm:$0xf]
    %v541 = vld [vmem:[%s539 + $0x4] sm:$0xf]
    %v542 = vld [vmem:[%s539 + $0x8] sm:$0xf]
    %v543 = vld [vmem:[%s539 + $0xc] sm:$0xf]
    %v548 = vunpack.c.l.b16 %v540
    %v549 = vunpack.c.l.b16 %v541
    %v550 = vunpack.c.l.b16 %v542
    %v551 = vunpack.c.l.b16 %v543
    %v552 = vpack.c.b16 %v549, %v548
    %v553 = vpack.c.b16 %v551, %v550
    %v557 = vsel %vm118, %v531, 0
    %v560 = vsel %vm118, %v532, 0
    %v563 = vsel %vm118, %v533, 0
    %v566 = vsel %vm118, %v534, 0
    %v569 = vsel %vm118, %v535, 0
    %v572 = vsel %vm118, %v536, 0
    %v575 = vsel %vm118, %v537, 0
    %v578 = vsel %vm118, %v538, 0
    %580 = vmatprep.subr.bf16.mxu0 0
    %581 = vmatpush1.bf16.msra.mxu0 %v552
    %582 = vmatprep.subr.bf16.mxu0 0
    %583 = vmatpush1.bf16.msra.mxu0 %v553
    %584 = vmatprep.subr.bf16.mxu0 0
    %585 = vmatpush1.bf16.msra.mxu0 0
    %586 = vmatprep.subr.bf16.mxu0 0
    %587 = vmatpush1.bf16.msra.mxu0 0
    %588 = vmatprep.subr.bf16.mxu0 0
    %589 = vmatpush1.bf16.msra.mxu0 0
    %590 = vmatprep.subr.bf16.mxu0 0
    %591 = vmatpush1.bf16.msra.mxu0 0
    %592 = vmatprep.subr.bf16.mxu0 0
    %593 = vmatpush1.bf16.msra.mxu0 0
    %594 = vmatprep.subr.bf16.mxu0 0
    %595 = vmatpush1.bf16.msra.mxu0 0
    %596 = vmatprep.subr.bf16.mxu0 0
    %597 = vmatpush1.bf16.msra.mxu0 0
    %598 = vmatprep.subr.bf16.mxu0 0
    %599 = vmatpush1.bf16.msra.mxu0 0
    %600 = vmatprep.subr.bf16.mxu0 0
    %601 = vmatpush1.bf16.msra.mxu0 0
    %602 = vmatprep.subr.bf16.mxu0 0
    %603 = vmatpush1.bf16.msra.mxu0 0
    %604 = vmatprep.subr.bf16.mxu0 0
    %605 = vmatpush1.bf16.msra.mxu0 0
    %606 = vmatprep.subr.bf16.mxu0 0
    %607 = vmatpush1.bf16.msra.mxu0 0
    %608 = vmatprep.subr.bf16.mxu0 0
    %609 = vmatpush1.bf16.msra.mxu0 0
    %610 = vmatprep.subr.bf16.mxu0 0
    %611 = vmatpush1.bf16.msra.mxu0 0
    %612 = vmatprep.mubr.bf16.mxu0 0
    %613 = vmatmul.mubr.bf16.gmra.mrb[0].mxu0 %v557
    %v614 = vpop.f32.mrb[0].mxu0
    %v615 = vadd.f32 0.0, %v614
    %v616 = vpop.f32.mrb[0].mxu0
    %v617 = vpop.f32.mrb[0].mxu0
    %v618 = vadd.f32 0.0, %v617
    %v619 = vpop.f32.mrb[0].mxu0
    %620 = vmatprep.mubr.bf16.mxu0 0
    %621 = vmatmul.mubr.bf16.gmra.mrb[0].mxu0 %v560
    %v622 = vpop.f32.mrb[0].mxu0
    %v623 = vadd.f32 0.0, %v622
    %v624 = vpop.f32.mrb[0].mxu0
    %v625 = vpop.f32.mrb[0].mxu0
    %v626 = vadd.f32 0.0, %v625
    %v627 = vpop.f32.mrb[0].mxu0
    %628 = vmatprep.mubr.bf16.mxu0 0
    %629 = vmatmul.mubr.bf16.gmra.mrb[0].mxu0 %v563
    %v630 = vpop.f32.mrb[0].mxu0
    %v631 = vadd.f32 0.0, %v630
    %v632 = vpop.f32.mrb[0].mxu0
    %v633 = vpop.f32.mrb[0].mxu0
    %v634 = vadd.f32 0.0, %v633
    %v635 = vpop.f32.mrb[0].mxu0
    %636 = vmatprep.mubr.bf16.mxu0 0
    %637 = vmatmul.mubr.bf16.gmra.mrb[0].mxu0 %v566
    %v638 = vpop.f32.mrb[0].mxu0
    %v639 = vadd.f32 0.0, %v638
    %v640 = vpop.f32.mrb[0].mxu0
    %v641 = vpop.f32.mrb[0].mxu0
    %v642 = vadd.f32 0.0, %v641
    %v643 = vpop.f32.mrb[0].mxu0
    %644 = vmatprep.mubr.bf16.mxu0 0
    %645 = vmatmul.mubr.bf16.gmra.mrb[0].mxu0 %v569
    %v646 = vpop.f32.mrb[0].mxu0
    %v647 = vadd.f32 0.0, %v646
    %v648 = vpop.f32.mrb[0].mxu0
    %v649 = vpop.f32.mrb[0].mxu0
    %v650 = vadd.f32 0.0, %v649
    %v651 = vpop.f32.mrb[0].mxu0
    %652 = vmatprep.mubr.bf16.mxu0 0
    %653 = vmatmul.mubr.bf16.gmra.mrb[0].mxu0 %v572
    %v654 = vpop.f32.mrb[0].mxu0
    %v655 = vadd.f32 0.0, %v654
    %v656 = vpop.f32.mrb[0].mxu0
    %v657 = vpop.f32.mrb[0].mxu0
    %v658 = vadd.f32 0.0, %v657
    %v659 = vpop.f32.mrb[0].mxu0
    %660 = vmatprep.mubr.bf16.mxu0 0
    %661 = vmatmul.mubr.bf16.gmra.mrb[0].mxu0 %v575
    %v662 = vpop.f32.mrb[0].mxu0
    %v663 = vadd.f32 0.0, %v662
    %v664 = vpop.f32.mrb[0].mxu0
    %v665 = vpop.f32.mrb[0].mxu0
    %v666 = vadd.f32 0.0, %v665
    %v667 = vpop.f32.mrb[0].mxu0
    %668 = vmatprep.mubr.bf16.mxu0 0
    %669 = vmatmul.mubr.bf16.gmra.mrb[0].mxu0 %v578
    %v670 = vpop.f32.mrb[0].mxu0
    %v671 = vadd.f32 0.0, %v670
    %v672 = vpop.f32.mrb[0].mxu0
    %v673 = vpop.f32.mrb[0].mxu0
    %v674 = vadd.f32 0.0, %v673
    %v675 = vpop.f32.mrb[0].mxu0
    %676 = vdwg.mxu0
    %v681 = vunpack.c.l.b16 %v511
    %v682 = vunpack.c.l.b16 %v512
    %v683 = vunpack.c.l.b16 %v513
    %v684 = vunpack.c.l.b16 %v514
    %v685 = vpack.c.b16 %v682, %v681
    %v686 = vpack.c.b16 %v684, %v683
    %v690 = vsel %vm118, %v503, 0
    %v693 = vsel %vm118, %v504, 0
    %v696 = vsel %vm118, %v505, 0
    %v699 = vsel %vm118, %v506, 0
    %v702 = vsel %vm118, %v507, 0
    %v705 = vsel %vm118, %v508, 0
    %v708 = vsel %vm118, %v509, 0
    %v711 = vsel %vm118, %v510, 0
    %713 = vmatprep.subr.bf16.mxu0 0
    %714 = vmatpush1.bf16.msra.mxu0 %v685
    %715 = vmatprep.subr.bf16.mxu0 0
    %716 = vmatpush1.bf16.msra.mxu0 %v686
    %717 = vmatprep.subr.bf16.mxu0 0
    %718 = vmatpush1.bf16.msra.mxu0 0
    %719 = vmatprep.subr.bf16.mxu0 0
    %720 = vmatpush1.bf16.msra.mxu0 0
    %721 = vmatprep.subr.bf16.mxu0 0
    %722 = vmatpush1.bf16.msra.mxu0 0
    %723 = vmatprep.subr.bf16.mxu0 0
    %724 = vmatpush1.bf16.msra.mxu0 0
    %725 = vmatprep.subr.bf16.mxu0 0
    %726 = vmatpush1.bf16.msra.mxu0 0
    %727 = vmatprep.subr.bf16.mxu0 0
    %728 = vmatpush1.bf16.msra.mxu0 0
    %729 = vmatprep.subr.bf16.mxu0 0
    %730 = vmatpush1.bf16.msra.mxu0 0
    %731 = vmatprep.subr.bf16.mxu0 0
    %732 = vmatpush1.bf16.msra.mxu0 0
    %733 = vmatprep.subr.bf16.mxu0 0
    %734 = vmatpush1.bf16.msra.mxu0 0
    %735 = vmatprep.subr.bf16.mxu0 0
    %736 = vmatpush1.bf16.msra.mxu0 0
    %737 = vmatprep.subr.bf16.mxu0 0
    %738 = vmatpush1.bf16.msra.mxu0 0
    %739 = vmatprep.subr.bf16.mxu0 0
    %740 = vmatpush1.bf16.msra.mxu0 0
    %741 = vmatprep.subr.bf16.mxu0 0
    %742 = vmatpush1.bf16.msra.mxu0 0
    %743 = vmatprep.subr.bf16.mxu0 0
    %744 = vmatpush1.bf16.msra.mxu0 0
    %745 = vmatprep.mubr.bf16.mxu0 0
    %746 = vmatmul.mubr.bf16.gmra.mrb[0].mxu0 %v690
    %v747 = vpop.f32.mrb[0].mxu0
    %v748 = vadd.f32 %v615, %v747
    %v749 = vpop.f32.mrb[0].mxu0
    %v750 = vpop.f32.mrb[0].mxu0
    %v751 = vadd.f32 %v618, %v750
    %v752 = vpop.f32.mrb[0].mxu0
    %753 = vmatprep.mubr.bf16.mxu0 0
    %754 = vmatmul.mubr.bf16.gmra.mrb[0].mxu0 %v693
    %v755 = vpop.f32.mrb[0].mxu0
    %v756 = vadd.f32 %v623, %v755
    %v757 = vpop.f32.mrb[0].mxu0
    %v758 = vpop.f32.mrb[0].mxu0
    %v759 = vadd.f32 %v626, %v758
    %v760 = vpop.f32.mrb[0].mxu0
    %761 = vmatprep.mubr.bf16.mxu0 0
    %762 = vmatmul.mubr.bf16.gmra.mrb[0].mxu0 %v696
    %v763 = vpop.f32.mrb[0].mxu0
    %v764 = vadd.f32 %v631, %v763
    %v765 = vpop.f32.mrb[0].mxu0
    %v766 = vpop.f32.mrb[0].mxu0
    %v767 = vadd.f32 %v634, %v766
    %v768 = vpop.f32.mrb[0].mxu0
    %769 = vmatprep.mubr.bf16.mxu0 0
    %770 = vmatmul.mubr.bf16.gmra.mrb[0].mxu0 %v699
    %v771 = vpop.f32.mrb[0].mxu0
    %v772 = vadd.f32 %v639, %v771
    %v773 = vpop.f32.mrb[0].mxu0
    %v774 = vpop.f32.mrb[0].mxu0
    %v775 = vadd.f32 %v642, %v774
    %v776 = vpop.f32.mrb[0].mxu0
    %777 = vmatprep.mubr.bf16.mxu0 0
    %778 = vmatmul.mubr.bf16.gmra.mrb[0].mxu0 %v702
    %v779 = vpop.f32.mrb[0].mxu0
    %v780 = vadd.f32 %v647, %v779
    %v781 = vpop.f32.mrb[0].mxu0
    %v782 = vpop.f32.mrb[0].mxu0
    %v783 = vadd.f32 %v650, %v782
    %v784 = vpop.f32.mrb[0].mxu0
    %785 = vmatprep.mubr.bf16.mxu0 0
    %786 = vmatmul.mubr.bf16.gmra.mrb[0].mxu0 %v705
    %v787 = vpop.f32.mrb[0].mxu0
    %v788 = vadd.f32 %v655, %v787
    %v789 = vpop.f32.mrb[0].mxu0
    %v790 = vpop.f32.mrb[0].mxu0
    %v791 = vadd.f32 %v658, %v790
    %v792 = vpop.f32.mrb[0].mxu0
    %793 = vmatprep.mubr.bf16.mxu0 0
    %794 = vmatmul.mubr.bf16.gmra.mrb[0].mxu0 %v708
    %v795 = vpop.f32.mrb[0].mxu0
    %v796 = vadd.f32 %v663, %v795
    %v797 = vpop.f32.mrb[0].mxu0
    %v798 = vpop.f32.mrb[0].mxu0
    %v799 = vadd.f32 %v666, %v798
    %v800 = vpop.f32.mrb[0].mxu0
    %801 = vmatprep.mubr.bf16.mxu0 0
    %802 = vmatmul.mubr.bf16.gmra.mrb[0].mxu0 %v711
    %v803 = vpop.f32.mrb[0].mxu0
    %v804 = vadd.f32 %v671, %v803
    %v805 = vpop.f32.mrb[0].mxu0
    %v806 = vpop.f32.mrb[0].mxu0
    %v807 = vadd.f32 %v674, %v806
    %v808 = vpop.f32.mrb[0].mxu0
    %809 = vdwg.mxu0
    %v810 = vld [vmem:[#allocation2 + $0x2] sm:$0xff]
    %v811 = vld [vmem:[#allocation2 + $0x12] sm:$0xff]
    %v812 = vld [vmem:[#allocation2 + $0x22] sm:$0xff]
    %v813 = vld [vmem:[#allocation2 + $0x32] sm:$0xff]
    %v814 = vld [vmem:[#allocation2 + $0x42] sm:$0xff]
    %v815 = vld [vmem:[#allocation2 + $0x52] sm:$0xff]
    %v816 = vld [vmem:[#allocation2 + $0x62] sm:$0xff]
    %v817 = vld [vmem:[#allocation2 + $0x72] sm:$0xff]
    %v818 = vld [vmem:[#allocation2 + $0xa2] sm:$0xff]
    %v819 = vld [vmem:[#allocation2 + $0xb2] sm:$0xff]
    %v820 = vld [vmem:[#allocation2 + $0xc2] sm:$0xff]
    %v821 = vld [vmem:[#allocation2 + $0xd2] sm:$0xff]
    %v822 = vld [vmem:[#allocation2 + $0xe2] sm:$0xff]
    %v823 = vld [vmem:[#allocation2 + $0xf2] sm:$0xff]
    %v824 = vld [vmem:[#allocation2 + $0x102] sm:$0xff]
    %v825 = vld [vmem:[#allocation2 + $0x112] sm:$0xff]
    %v826 = vpack.c.bf16 %v811, %v810
    %v827 = vpack.c.bf16 %v813, %v812
    %v828 = vpack.c.bf16 %v815, %v814
    %v829 = vpack.c.bf16 %v817, %v816
    %v830 = vpack.c.bf16 %v819, %v818
    %v831 = vpack.c.bf16 %v821, %v820
    %v832 = vpack.c.bf16 %v823, %v822
    %v833 = vpack.c.bf16 %v825, %v824
    %s834 = scalar_lea.vmem [#allocation8], 32
    %v835 = vld [vmem:[%s834] sm:$0xf]
    %v836 = vld [vmem:[%s834 + $0x4] sm:$0xf]
    %v837 = vld [vmem:[%s834 + $0x8] sm:$0xf]
    %v838 = vld [vmem:[%s834 + $0xc] sm:$0xf]
    %v843 = vunpack.c.l.b16 %v835
    %v844 = vunpack.c.l.b16 %v836
    %v845 = vunpack.c.l.b16 %v837
    %v846 = vunpack.c.l.b16 %v838
    %v847 = vpack.c.b16 %v844, %v843
    %v848 = vpack.c.b16 %v846, %v845
    %v852 = vsel %vm118, %v826, 0
    %v855 = vsel %vm118, %v827, 0
    %v858 = vsel %vm118, %v828, 0
    %v861 = vsel %vm118, %v829, 0
    %v864 = vsel %vm118, %v830, 0
    %v867 = vsel %vm118, %v831, 0
    %v870 = vsel %vm118, %v832, 0
    %v873 = vsel %vm118, %v833, 0
    %875 = vmatprep.subr.bf16.mxu0 0
    %876 = vmatpush1.bf16.msra.mxu0 %v847
    %877 = vmatprep.subr.bf16.mxu0 0
    %878 = vmatpush1.bf16.msra.mxu0 %v848
    %879 = vmatprep.subr.bf16.mxu0 0
    %880 = vmatpush1.bf16.msra.mxu0 0
    %881 = vmatprep.subr.bf16.mxu0 0
    %882 = vmatpush1.bf16.msra.mxu0 0
    %883 = vmatprep.subr.bf16.mxu0 0
    %884 = vmatpush1.bf16.msra.mxu0 0
    %885 = vmatprep.subr.bf16.mxu0 0
    %886 = vmatpush1.bf16.msra.mxu0 0
    %887 = vmatprep.subr.bf16.mxu0 0
    %888 = vmatpush1.bf16.msra.mxu0 0
    %889 = vmatprep.subr.bf16.mxu0 0
    %890 = vmatpush1.bf16.msra.mxu0 0
    %891 = vmatprep.subr.bf16.mxu0 0
    %892 = vmatpush1.bf16.msra.mxu0 0
    %893 = vmatprep.subr.bf16.mxu0 0
    %894 = vmatpush1.bf16.msra.mxu0 0
    %895 = vmatprep.subr.bf16.mxu0 0
    %896 = vmatpush1.bf16.msra.mxu0 0
    %897 = vmatprep.subr.bf16.mxu0 0
    %898 = vmatpush1.bf16.msra.mxu0 0
    %899 = vmatprep.subr.bf16.mxu0 0
    %900 = vmatpush1.bf16.msra.mxu0 0
    %901 = vmatprep.subr.bf16.mxu0 0
    %902 = vmatpush1.bf16.msra.mxu0 0
    %903 = vmatprep.subr.bf16.mxu0 0
    %904 = vmatpush1.bf16.msra.mxu0 0
    %905 = vmatprep.subr.bf16.mxu0 0
    %906 = vmatpush1.bf16.msra.mxu0 0
    %907 = vmatprep.mubr.bf16.mxu0 0
    %908 = vmatmul.mubr.bf16.gmra.mrb[0].mxu0 %v852
    %v909 = vpop.f32.mrb[0].mxu0
    %v910 = vadd.f32 0.0, %v909
    %v911 = vpop.f32.mrb[0].mxu0
    %v912 = vpop.f32.mrb[0].mxu0
    %v913 = vadd.f32 0.0, %v912
    %v914 = vpop.f32.mrb[0].mxu0
    %915 = vmatprep.mubr.bf16.mxu0 0
    %916 = vmatmul.mubr.bf16.gmra.mrb[0].mxu0 %v855
    %v917 = vpop.f32.mrb[0].mxu0
    %v918 = vadd.f32 0.0, %v917
    %v919 = vpop.f32.mrb[0].mxu0
    %v920 = vpop.f32.mrb[0].mxu0
    %v921 = vadd.f32 0.0, %v920
    %v922 = vpop.f32.mrb[0].mxu0
    %923 = vmatprep.mubr.bf16.mxu0 0
    %924 = vmatmul.mubr.bf16.gmra.mrb[0].mxu0 %v858
    %v925 = vpop.f32.mrb[0].mxu0
    %v926 = vadd.f32 0.0, %v925
    %v927 = vpop.f32.mrb[0].mxu0
    %v928 = vpop.f32.mrb[0].mxu0
    %v929 = vadd.f32 0.0, %v928
    %v930 = vpop.f32.mrb[0].mxu0
    %931 = vmatprep.mubr.bf16.mxu0 0
    %932 = vmatmul.mubr.bf16.gmra.mrb[0].mxu0 %v861
    %v933 = vpop.f32.mrb[0].mxu0
    %v934 = vadd.f32 0.0, %v933
    %v935 = vpop.f32.mrb[0].mxu0
    %v936 = vpop.f32.mrb[0].mxu0
    %v937 = vadd.f32 0.0, %v936
    %v938 = vpop.f32.mrb[0].mxu0
    %939 = vmatprep.mubr.bf16.mxu0 0
    %940 = vmatmul.mubr.bf16.gmra.mrb[0].mxu0 %v864
    %v941 = vpop.f32.mrb[0].mxu0
    %v942 = vadd.f32 0.0, %v941
    %v943 = vpop.f32.mrb[0].mxu0
    %v944 = vpop.f32.mrb[0].mxu0
    %v945 = vadd.f32 0.0, %v944
    %v946 = vpop.f32.mrb[0].mxu0
    %947 = vmatprep.mubr.bf16.mxu0 0
    %948 = vmatmul.mubr.bf16.gmra.mrb[0].mxu0 %v867
    %v949 = vpop.f32.mrb[0].mxu0
    %v950 = vadd.f32 0.0, %v949
    %v951 = vpop.f32.mrb[0].mxu0
    %v952 = vpop.f32.mrb[0].mxu0
    %v953 = vadd.f32 0.0, %v952
    %v954 = vpop.f32.mrb[0].mxu0
    %955 = vmatprep.mubr.bf16.mxu0 0
    %956 = vmatmul.mubr.bf16.gmra.mrb[0].mxu0 %v870
    %v957 = vpop.f32.mrb[0].mxu0
    %v958 = vadd.f32 0.0, %v957
    %v959 = vpop.f32.mrb[0].mxu0
    %v960 = vpop.f32.mrb[0].mxu0
    %v961 = vadd.f32 0.0, %v960
    %v962 = vpop.f32.mrb[0].mxu0
    %963 = vmatprep.mubr.bf16.mxu0 0
    %964 = vmatmul.mubr.bf16.gmra.mrb[0].mxu0 %v873
    %v965 = vpop.f32.mrb[0].mxu0
    %v966 = vadd.f32 0.0, %v965
    %v967 = vpop.f32.mrb[0].mxu0
    %v968 = vpop.f32.mrb[0].mxu0
    %v969 = vadd.f32 0.0, %v968
    %v970 = vpop.f32.mrb[0].mxu0
    %971 = vdwg.mxu0
    %v972 = vadd.f32 %v748, %v910
    %v973 = vadd.f32 %v751, %v913
    %v974 = vadd.f32 %v756, %v918
    %v975 = vadd.f32 %v759, %v921
    %v976 = vadd.f32 %v764, %v926
    %v977 = vadd.f32 %v767, %v929
    %v978 = vadd.f32 %v772, %v934
    %v979 = vadd.f32 %v775, %v937
    %v980 = vadd.f32 %v780, %v942
    %v981 = vadd.f32 %v783, %v945
    %v982 = vadd.f32 %v788, %v950
    %v983 = vadd.f32 %v791, %v953
    %v984 = vadd.f32 %v796, %v958
    %v985 = vadd.f32 %v799, %v961
    %v986 = vadd.f32 %v804, %v966
    %v987 = vadd.f32 %v807, %v969
    %v988 = vld [vmem:[%s470] sm:$0xff]
    %v989 = vld [vmem:[%s470 + $0x10] sm:$0xff]
    %v990 = vld [vmem:[%s470 + $0x20] sm:$0xff]
    %v991 = vld [vmem:[%s470 + $0x30] sm:$0xff]
    %v992 = vld [vmem:[%s470 + $0x40] sm:$0xff]
    %v993 = vld [vmem:[%s470 + $0x50] sm:$0xff]
    %v994 = vld [vmem:[%s470 + $0x60] sm:$0xff]
    %v995 = vld [vmem:[%s470 + $0x70] sm:$0xff]
    %v996 = vld [vmem:[%s470 + $0xa0] sm:$0xff]
    %v997 = vld [vmem:[%s470 + $0xb0] sm:$0xff]
    %v998 = vld [vmem:[%s470 + $0xc0] sm:$0xff]
    %v999 = vld [vmem:[%s470 + $0xd0] sm:$0xff]
    %v1000 = vld [vmem:[%s470 + $0xe0] sm:$0xff]
    %v1001 = vld [vmem:[%s470 + $0xf0] sm:$0xff]
    %v1002 = vld [vmem:[%s470 + $0x100] sm:$0xff]
    %v1003 = vld [vmem:[%s470 + $0x110] sm:$0xff]
    %v1004 = vpack.c.bf16 %v989, %v988
    %v1005 = vpack.c.bf16 %v991, %v990
    %v1006 = vpack.c.bf16 %v993, %v992
    %v1007 = vpack.c.bf16 %v995, %v994
    %v1008 = vpack.c.bf16 %v997, %v996
    %v1009 = vpack.c.bf16 %v999, %v998
    %v1010 = vpack.c.bf16 %v1001, %v1000
    %v1011 = vpack.c.bf16 %v1003, %v1002
    %s1012 = scalar_lea.vmem [#allocation8], 48
    %v1013 = vld [vmem:[%s1012] sm:$0xf]
    %v1014 = vld [vmem:[%s1012 + $0x4] sm:$0xf]
    %v1015 = vld [vmem:[%s1012 + $0x8] sm:$0xf]
    %v1016 = vld [vmem:[%s1012 + $0xc] sm:$0xf]
    %v1021 = vunpack.c.l.b16 %v1013
    %v1022 = vunpack.c.l.b16 %v1014
    %v1023 = vunpack.c.l.b16 %v1015
    %v1024 = vunpack.c.l.b16 %v1016
    %v1025 = vpack.c.b16 %v1022, %v1021
    %v1026 = vpack.c.b16 %v1024, %v1023
    %v1030 = vsel %vm118, %v1004, 0
    %v1033 = vsel %vm118, %v1005, 0
    %v1036 = vsel %vm118, %v1006, 0
    %v1039 = vsel %vm118, %v1007, 0
    %v1042 = vsel %vm118, %v1008, 0
    %v1045 = vsel %vm118, %v1009, 0
    %v1048 = vsel %vm118, %v1010, 0
    %v1051 = vsel %vm118, %v1011, 0
    %1053 = vmatprep.subr.bf16.mxu0 0
    %1054 = vmatpush1.bf16.msra.mxu0 %v1025
    %1055 = vmatprep.subr.bf16.mxu0 0
    %1056 = vmatpush1.bf16.msra.mxu0 %v1026
    %1057 = vmatprep.subr.bf16.mxu0 0
    %1058 = vmatpush1.bf16.msra.mxu0 0
    %1059 = vmatprep.subr.bf16.mxu0 0
    %1060 = vmatpush1.bf16.msra.mxu0 0
    %1061 = vmatprep.subr.bf16.mxu0 0
    %1062 = vmatpush1.bf16.msra.mxu0 0
    %1063 = vmatprep.subr.bf16.mxu0 0
    %1064 = vmatpush1.bf16.msra.mxu0 0
    %1065 = vmatprep.subr.bf16.mxu0 0
    %1066 = vmatpush1.bf16.msra.mxu0 0
    %1067 = vmatprep.subr.bf16.mxu0 0
    %1068 = vmatpush1.bf16.msra.mxu0 0
    %1069 = vmatprep.subr.bf16.mxu0 0
    %1070 = vmatpush1.bf16.msra.mxu0 0
    %1071 = vmatprep.subr.bf16.mxu0 0
    %1072 = vmatpush1.bf16.msra.mxu0 0
    %1073 = vmatprep.subr.bf16.mxu0 0
    %1074 = vmatpush1.bf16.msra.mxu0 0
    %1075 = vmatprep.subr.bf16.mxu0 0
    %1076 = vmatpush1.bf16.msra.mxu0 0
    %1077 = vmatprep.subr.bf16.mxu0 0
    %1078 = vmatpush1.bf16.msra.mxu0 0
    %1079 = vmatprep.subr.bf16.mxu0 0
    %1080 = vmatpush1.bf16.msra.mxu0 0
    %1081 = vmatprep.subr.bf16.mxu0 0
    %1082 = vmatpush1.bf16.msra.mxu0 0
    %1083 = vmatprep.subr.bf16.mxu0 0
    %1084 = vmatpush1.bf16.msra.mxu0 0
    %1085 = vmatprep.mubr.bf16.mxu0 0
    %1086 = vmatmul.mubr.bf16.gmra.mrb[0].mxu0 %v1030
    %v1087 = vpop.f32.mrb[0].mxu0
    %v1088 = vadd.f32 0.0, %v1087
    %v1089 = vpop.f32.mrb[0].mxu0
    %v1090 = vpop.f32.mrb[0].mxu0
    %v1091 = vadd.f32 0.0, %v1090
    %v1092 = vpop.f32.mrb[0].mxu0
    %1093 = vmatprep.mubr.bf16.mxu0 0
    %1094 = vmatmul.mubr.bf16.gmra.mrb[0].mxu0 %v1033
    %v1095 = vpop.f32.mrb[0].mxu0
    %v1096 = vadd.f32 0.0, %v1095
    %v1097 = vpop.f32.mrb[0].mxu0
    %v1098 = vpop.f32.mrb[0].mxu0
    %v1099 = vadd.f32 0.0, %v1098
    %v1100 = vpop.f32.mrb[0].mxu0
    %1101 = vmatprep.mubr.bf16.mxu0 0
    %1102 = vmatmul.mubr.bf16.gmra.mrb[0].mxu0 %v1036
    %v1103 = vpop.f32.mrb[0].mxu0
    %v1104 = vadd.f32 0.0, %v1103
    %v1105 = vpop.f32.mrb[0].mxu0
    %v1106 = vpop.f32.mrb[0].mxu0
    %v1107 = vadd.f32 0.0, %v1106
    %v1108 = vpop.f32.mrb[0].mxu0
    %1109 = vmatprep.mubr.bf16.mxu0 0
    %1110 = vmatmul.mubr.bf16.gmra.mrb[0].mxu0 %v1039
    %v1111 = vpop.f32.mrb[0].mxu0
    %v1112 = vadd.f32 0.0, %v1111
    %v1113 = vpop.f32.mrb[0].mxu0
    %v1114 = vpop.f32.mrb[0].mxu0
    %v1115 = vadd.f32 0.0, %v1114
    %v1116 = vpop.f32.mrb[0].mxu0
    %1117 = vmatprep.mubr.bf16.mxu0 0
    %1118 = vmatmul.mubr.bf16.gmra.mrb[0].mxu0 %v1042
    %v1119 = vpop.f32.mrb[0].mxu0
    %v1120 = vadd.f32 0.0, %v1119
    %v1121 = vpop.f32.mrb[0].mxu0
    %v1122 = vpop.f32.mrb[0].mxu0
    %v1123 = vadd.f32 0.0, %v1122
    %v1124 = vpop.f32.mrb[0].mxu0
    %1125 = vmatprep.mubr.bf16.mxu0 0
    %1126 = vmatmul.mubr.bf16.gmra.mrb[0].mxu0 %v1045
    %v1127 = vpop.f32.mrb[0].mxu0
    %v1128 = vadd.f32 0.0, %v1127
    %v1129 = vpop.f32.mrb[0].mxu0
    %v1130 = vpop.f32.mrb[0].mxu0
    %v1131 = vadd.f32 0.0, %v1130
    %v1132 = vpop.f32.mrb[0].mxu0
    %1133 = vmatprep.mubr.bf16.mxu0 0
    %1134 = vmatmul.mubr.bf16.gmra.mrb[0].mxu0 %v1048
    %v1135 = vpop.f32.mrb[0].mxu0
    %v1136 = vadd.f32 0.0, %v1135
    %v1137 = vpop.f32.mrb[0].mxu0
    %v1138 = vpop.f32.mrb[0].mxu0
    %v1139 = vadd.f32 0.0, %v1138
    %v1140 = vpop.f32.mrb[0].mxu0
    %1141 = vmatprep.mubr.bf16.mxu0 0
    %1142 = vmatmul.mubr.bf16.gmra.mrb[0].mxu0 %v1051
    %v1143 = vpop.f32.mrb[0].mxu0
    %v1144 = vadd.f32 0.0, %v1143
    %v1145 = vpop.f32.mrb[0].mxu0
    %v1146 = vpop.f32.mrb[0].mxu0
    %v1147 = vadd.f32 0.0, %v1146
    %v1148 = vpop.f32.mrb[0].mxu0
    %1149 = vdwg.mxu0
    %v1150 = vadd.f32 %v972, %v1088
    %v1151 = vadd.f32 %v973, %v1091
    %v1152 = vadd.f32 %v974, %v1096
    %v1153 = vadd.f32 %v975, %v1099
    %v1154 = vadd.f32 %v976, %v1104
    %v1155 = vadd.f32 %v977, %v1107
    %v1156 = vadd.f32 %v978, %v1112
    %v1157 = vadd.f32 %v979, %v1115
    %v1158 = vadd.f32 %v980, %v1120
    %v1159 = vadd.f32 %v981, %v1123
    %v1160 = vadd.f32 %v982, %v1128
    %v1161 = vadd.f32 %v983, %v1131
    %v1162 = vadd.f32 %v984, %v1136
    %v1163 = vadd.f32 %v985, %v1139
    %v1164 = vadd.f32 %v986, %v1144
    %v1165 = vadd.f32 %v987, %v1147
    %v1166 = vld [vmem:[%s470 + $0x1] sm:$0xff]
    %v1167 = vld [vmem:[%s470 + $0x11] sm:$0xff]
    %v1168 = vld [vmem:[%s470 + $0x21] sm:$0xff]
    %v1169 = vld [vmem:[%s470 + $0x31] sm:$0xff]
    %v1170 = vld [vmem:[%s470 + $0x41] sm:$0xff]
    %v1171 = vld [vmem:[%s470 + $0x51] sm:$0xff]
    %v1172 = vld [vmem:[%s470 + $0x61] sm:$0xff]
    %v1173 = vld [vmem:[%s470 + $0x71] sm:$0xff]
    %v1174 = vld [vmem:[%s470 + $0xa1] sm:$0xff]
    %v1175 = vld [vmem:[%s470 + $0xb1] sm:$0xff]
    %v1176 = vld [vmem:[%s470 + $0xc1] sm:$0xff]
    %v1177 = vld [vmem:[%s470 + $0xd1] sm:$0xff]
    %v1178 = vld [vmem:[%s470 + $0xe1] sm:$0xff]
    %v1179 = vld [vmem:[%s470 + $0xf1] sm:$0xff]
    %v1180 = vld [vmem:[%s470 + $0x101] sm:$0xff]
    %v1181 = vld [vmem:[%s470 + $0x111] sm:$0xff]
    %v1182 = vpack.c.bf16 %v1167, %v1166
    %v1183 = vpack.c.bf16 %v1169, %v1168
    %v1184 = vpack.c.bf16 %v1171, %v1170
    %v1185 = vpack.c.bf16 %v1173, %v1172
    %v1186 = vpack.c.bf16 %v1175, %v1174
    %v1187 = vpack.c.bf16 %v1177, %v1176
    %v1188 = vpack.c.bf16 %v1179, %v1178
    %v1189 = vpack.c.bf16 %v1181, %v1180
    %s1190 = scalar_lea.vmem [#allocation8], 64
    %v1191 = vld [vmem:[%s1190] sm:$0xf]
    %v1192 = vld [vmem:[%s1190 + $0x4] sm:$0xf]
    %v1193 = vld [vmem:[%s1190 + $0x8] sm:$0xf]
    %v1194 = vld [vmem:[%s1190 + $0xc] sm:$0xf]
    %v1199 = vunpack.c.l.b16 %v1191
    %v1200 = vunpack.c.l.b16 %v1192
    %v1201 = vunpack.c.l.b16 %v1193
    %v1202 = vunpack.c.l.b16 %v1194
    %v1203 = vpack.c.b16 %v1200, %v1199
    %v1204 = vpack.c.b16 %v1202, %v1201
    %v1208 = vsel %vm118, %v1182, 0
    %v1211 = vsel %vm118, %v1183, 0
    %v1214 = vsel %vm118, %v1184, 0
    %v1217 = vsel %vm118, %v1185, 0
    %v1220 = vsel %vm118, %v1186, 0
    %v1223 = vsel %vm118, %v1187, 0
    %v1226 = vsel %vm118, %v1188, 0
    %v1229 = vsel %vm118, %v1189, 0
    %1231 = vmatprep.subr.bf16.mxu0 0
    %1232 = vmatpush1.bf16.msra.mxu0 %v1203
    %1233 = vmatprep.subr.bf16.mxu0 0
    %1234 = vmatpush1.bf16.msra.mxu0 %v1204
    %1235 = vmatprep.subr.bf16.mxu0 0
    %1236 = vmatpush1.bf16.msra.mxu0 0
    %1237 = vmatprep.subr.bf16.mxu0 0
    %1238 = vmatpush1.bf16.msra.mxu0 0
    %1239 = vmatprep.subr.bf16.mxu0 0
    %1240 = vmatpush1.bf16.msra.mxu0 0
    %1241 = vmatprep.subr.bf16.mxu0 0
    %1242 = vmatpush1.bf16.msra.mxu0 0
    %1243 = vmatprep.subr.bf16.mxu0 0
    %1244 = vmatpush1.bf16.msra.mxu0 0
    %1245 = vmatprep.subr.bf16.mxu0 0
    %1246 = vmatpush1.bf16.msra.mxu0 0
    %1247 = vmatprep.subr.bf16.mxu0 0
    %1248 = vmatpush1.bf16.msra.mxu0 0
    %1249 = vmatprep.subr.bf16.mxu0 0
    %1250 = vmatpush1.bf16.msra.mxu0 0
    %1251 = vmatprep.subr.bf16.mxu0 0
    %1252 = vmatpush1.bf16.msra.mxu0 0
    %1253 = vmatprep.subr.bf16.mxu0 0
    %1254 = vmatpush1.bf16.msra.mxu0 0
    %1255 = vmatprep.subr.bf16.mxu0 0
    %1256 = vmatpush1.bf16.msra.mxu0 0
    %1257 = vmatprep.subr.bf16.mxu0 0
    %1258 = vmatpush1.bf16.msra.mxu0 0
    %1259 = vmatprep.subr.bf16.mxu0 0
    %1260 = vmatpush1.bf16.msra.mxu0 0
    %1261 = vmatprep.subr.bf16.mxu0 0
    %1262 = vmatpush1.bf16.msra.mxu0 0
    %1263 = vmatprep.mubr.bf16.mxu0 0
    %1264 = vmatmul.mubr.bf16.gmra.mrb[0].mxu0 %v1208
    %v1265 = vpop.f32.mrb[0].mxu0
    %v1266 = vadd.f32 0.0, %v1265
    %v1267 = vpop.f32.mrb[0].mxu0
    %v1268 = vpop.f32.mrb[0].mxu0
    %v1269 = vadd.f32 0.0, %v1268
    %v1270 = vpop.f32.mrb[0].mxu0
    %1271 = vmatprep.mubr.bf16.mxu0 0
    %1272 = vmatmul.mubr.bf16.gmra.mrb[0].mxu0 %v1211
    %v1273 = vpop.f32.mrb[0].mxu0
    %v1274 = vadd.f32 0.0, %v1273
    %v1275 = vpop.f32.mrb[0].mxu0
    %v1276 = vpop.f32.mrb[0].mxu0
    %v1277 = vadd.f32 0.0, %v1276
    %v1278 = vpop.f32.mrb[0].mxu0
    %1279 = vmatprep.mubr.bf16.mxu0 0
    %1280 = vmatmul.mubr.bf16.gmra.mrb[0].mxu0 %v1214
    %v1281 = vpop.f32.mrb[0].mxu0
    %v1282 = vadd.f32 0.0, %v1281
    %v1283 = vpop.f32.mrb[0].mxu0
    %v1284 = vpop.f32.mrb[0].mxu0
    %v1285 = vadd.f32 0.0, %v1284
    %v1286 = vpop.f32.mrb[0].mxu0
    %1287 = vmatprep.mubr.bf16.mxu0 0
    %1288 = vmatmul.mubr.bf16.gmra.mrb[0].mxu0 %v1217
    %v1289 = vpop.f32.mrb[0].mxu0
    %v1290 = vadd.f32 0.0, %v1289
    %v1291 = vpop.f32.mrb[0].mxu0
    %v1292 = vpop.f32.mrb[0].mxu0
    %v1293 = vadd.f32 0.0, %v1292
    %v1294 = vpop.f32.mrb[0].mxu0
    %1295 = vmatprep.mubr.bf16.mxu0 0
    %1296 = vmatmul.mubr.bf16.gmra.mrb[0].mxu0 %v1220
    %v1297 = vpop.f32.mrb[0].mxu0
    %v1298 = vadd.f32 0.0, %v1297
    %v1299 = vpop.f32.mrb[0].mxu0
    %v1300 = vpop.f32.mrb[0].mxu0
    %v1301 = vadd.f32 0.0, %v1300
    %v1302 = vpop.f32.mrb[0].mxu0
    %1303 = vmatprep.mubr.bf16.mxu0 0
    %1304 = vmatmul.mubr.bf16.gmra.mrb[0].mxu0 %v1223
    %v1305 = vpop.f32.mrb[0].mxu0
    %v1306 = vadd.f32 0.0, %v1305
    %v1307 = vpop.f32.mrb[0].mxu0
    %v1308 = vpop.f32.mrb[0].mxu0
    %v1309 = vadd.f32 0.0, %v1308
    %v1310 = vpop.f32.mrb[0].mxu0
    %1311 = vmatprep.mubr.bf16.mxu0 0
    %1312 = vmatmul.mubr.bf16.gmra.mrb[0].mxu0 %v1226
    %v1313 = vpop.f32.mrb[0].mxu0
    %v1314 = vadd.f32 0.0, %v1313
    %v1315 = vpop.f32.mrb[0].mxu0
    %v1316 = vpop.f32.mrb[0].mxu0
    %v1317 = vadd.f32 0.0, %v1316
    %v1318 = vpop.f32.mrb[0].mxu0
    %1319 = vmatprep.mubr.bf16.mxu0 0
    %1320 = vmatmul.mubr.bf16.gmra.mrb[0].mxu0 %v1229
    %v1321 = vpop.f32.mrb[0].mxu0
    %v1322 = vadd.f32 0.0, %v1321
    %v1323 = vpop.f32.mrb[0].mxu0
    %v1324 = vpop.f32.mrb[0].mxu0
    %v1325 = vadd.f32 0.0, %v1324
    %v1326 = vpop.f32.mrb[0].mxu0
    %1327 = vdwg.mxu0
    %v1328 = vadd.f32 %v1150, %v1266
    %v1329 = vadd.f32 %v1151, %v1269
    %v1330 = vadd.f32 %v1152, %v1274
    %v1331 = vadd.f32 %v1153, %v1277
    %v1332 = vadd.f32 %v1154, %v1282
    %v1333 = vadd.f32 %v1155, %v1285
    %v1334 = vadd.f32 %v1156, %v1290
    %v1335 = vadd.f32 %v1157, %v1293
    %v1336 = vadd.f32 %v1158, %v1298
    %v1337 = vadd.f32 %v1159, %v1301
    %v1338 = vadd.f32 %v1160, %v1306
    %v1339 = vadd.f32 %v1161, %v1309
    %v1340 = vadd.f32 %v1162, %v1314
    %v1341 = vadd.f32 %v1163, %v1317
    %v1342 = vadd.f32 %v1164, %v1322
    %v1343 = vadd.f32 %v1165, %v1325
    %v1344 = vld [vmem:[%s470 + $0x2] sm:$0xff]
    %v1345 = vld [vmem:[%s470 + $0x12] sm:$0xff]
    %v1346 = vld [vmem:[%s470 + $0x22] sm:$0xff]
    %v1347 = vld [vmem:[%s470 + $0x32] sm:$0xff]
    %v1348 = vld [vmem:[%s470 + $0x42] sm:$0xff]
    %v1349 = vld [vmem:[%s470 + $0x52] sm:$0xff]
    %v1350 = vld [vmem:[%s470 + $0x62] sm:$0xff]
    %v1351 = vld [vmem:[%s470 + $0x72] sm:$0xff]
    %v1352 = vld [vmem:[%s470 + $0xa2] sm:$0xff]
    %v1353 = vld [vmem:[%s470 + $0xb2] sm:$0xff]
    %v1354 = vld [vmem:[%s470 + $0xc2] sm:$0xff]
    %v1355 = vld [vmem:[%s470 + $0xd2] sm:$0xff]
    %v1356 = vld [vmem:[%s470 + $0xe2] sm:$0xff]
    %v1357 = vld [vmem:[%s470 + $0xf2] sm:$0xff]
    %v1358 = vld [vmem:[%s470 + $0x102] sm:$0xff]
    %v1359 = vld [vmem:[%s470 + $0x112] sm:$0xff]
    %v1360 = vpack.c.bf16 %v1345, %v1344
    %v1361 = vpack.c.bf16 %v1347, %v1346
    %v1362 = vpack.c.bf16 %v1349, %v1348
    %v1363 = vpack.c.bf16 %v1351, %v1350
    %v1364 = vpack.c.bf16 %v1353, %v1352
    %v1365 = vpack.c.bf16 %v1355, %v1354
    %v1366 = vpack.c.bf16 %v1357, %v1356
    %v1367 = vpack.c.bf16 %v1359, %v1358
    %s1368 = scalar_lea.vmem [#allocation8], 80
    %v1369 = vld [vmem:[%s1368] sm:$0xf]
    %v1370 = vld [vmem:[%s1368 + $0x4] sm:$0xf]
    %v1371 = vld [vmem:[%s1368 + $0x8] sm:$0xf]
    %v1372 = vld [vmem:[%s1368 + $0xc] sm:$0xf]
    %v1377 = vunpack.c.l.b16 %v1369
    %v1378 = vunpack.c.l.b16 %v1370
    %v1379 = vunpack.c.l.b16 %v1371
    %v1380 = vunpack.c.l.b16 %v1372
    %v1381 = vpack.c.b16 %v1378, %v1377
    %v1382 = vpack.c.b16 %v1380, %v1379
    %v1386 = vsel %vm118, %v1360, 0
    %v1389 = vsel %vm118, %v1361, 0
    %v1392 = vsel %vm118, %v1362, 0
    %v1395 = vsel %vm118, %v1363, 0
    %v1398 = vsel %vm118, %v1364, 0
    %v1401 = vsel %vm118, %v1365, 0
    %v1404 = vsel %vm118, %v1366, 0
    %v1407 = vsel %vm118, %v1367, 0
    %1409 = vmatprep.subr.bf16.mxu0 0
    %1410 = vmatpush1.bf16.msra.mxu0 %v1381
    %1411 = vmatprep.subr.bf16.mxu0 0
    %1412 = vmatpush1.bf16.msra.mxu0 %v1382
    %1413 = vmatprep.subr.bf16.mxu0 0
    %1414 = vmatpush1.bf16.msra.mxu0 0
    %1415 = vmatprep.subr.bf16.mxu0 0
    %1416 = vmatpush1.bf16.msra.mxu0 0
    %1417 = vmatprep.subr.bf16.mxu0 0
    %1418 = vmatpush1.bf16.msra.mxu0 0
    %1419 = vmatprep.subr.bf16.mxu0 0
    %1420 = vmatpush1.bf16.msra.mxu0 0
    %1421 = vmatprep.subr.bf16.mxu0 0
    %1422 = vmatpush1.bf16.msra.mxu0 0
    %1423 = vmatprep.subr.bf16.mxu0 0
    %1424 = vmatpush1.bf16.msra.mxu0 0
    %1425 = vmatprep.subr.bf16.mxu0 0
    %1426 = vmatpush1.bf16.msra.mxu0 0
    %1427 = vmatprep.subr.bf16.mxu0 0
    %1428 = vmatpush1.bf16.msra.mxu0 0
    %1429 = vmatprep.subr.bf16.mxu0 0
    %1430 = vmatpush1.bf16.msra.mxu0 0
    %1431 = vmatprep.subr.bf16.mxu0 0
    %1432 = vmatpush1.bf16.msra.mxu0 0
    %1433 = vmatprep.subr.bf16.mxu0 0
    %1434 = vmatpush1.bf16.msra.mxu0 0
    %1435 = vmatprep.subr.bf16.mxu0 0
    %1436 = vmatpush1.bf16.msra.mxu0 0
    %1437 = vmatprep.subr.bf16.mxu0 0
    %1438 = vmatpush1.bf16.msra.mxu0 0
    %1439 = vmatprep.subr.bf16.mxu0 0
    %1440 = vmatpush1.bf16.msra.mxu0 0
    %1441 = vmatprep.mubr.bf16.mxu0 0
    %1442 = vmatmul.mubr.bf16.gmra.mrb[0].mxu0 %v1386
    %v1443 = vpop.f32.mrb[0].mxu0
    %v1444 = vadd.f32 0.0, %v1443
    %v1445 = vpop.f32.mrb[0].mxu0
    %v1446 = vpop.f32.mrb[0].mxu0
    %v1447 = vadd.f32 0.0, %v1446
    %v1448 = vpop.f32.mrb[0].mxu0
    %1449 = vmatprep.mubr.bf16.mxu0 0
    %1450 = vmatmul.mubr.bf16.gmra.mrb[0].mxu0 %v1389
    %v1451 = vpop.f32.mrb[0].mxu0
    %v1452 = vadd.f32 0.0, %v1451
    %v1453 = vpop.f32.mrb[0].mxu0
    %v1454 = vpop.f32.mrb[0].mxu0
    %v1455 = vadd.f32 0.0, %v1454
    %v1456 = vpop.f32.mrb[0].mxu0
    %1457 = vmatprep.mubr.bf16.mxu0 0
    %1458 = vmatmul.mubr.bf16.gmra.mrb[0].mxu0 %v1392
    %v1459 = vpop.f32.mrb[0].mxu0
    %v1460 = vadd.f32 0.0, %v1459
    %v1461 = vpop.f32.mrb[0].mxu0
    %v1462 = vpop.f32.mrb[0].mxu0
    %v1463 = vadd.f32 0.0, %v1462
    %v1464 = vpop.f32.mrb[0].mxu0
    %1465 = vmatprep.mubr.bf16.mxu0 0
    %1466 = vmatmul.mubr.bf16.gmra.mrb[0].mxu0 %v1395
    %v1467 = vpop.f32.mrb[0].mxu0
    %v1468 = vadd.f32 0.0, %v1467
    %v1469 = vpop.f32.mrb[0].mxu0
    %v1470 = vpop.f32.mrb[0].mxu0
    %v1471 = vadd.f32 0.0, %v1470
    %v1472 = vpop.f32.mrb[0].mxu0
    %1473 = vmatprep.mubr.bf16.mxu0 0
    %1474 = vmatmul.mubr.bf16.gmra.mrb[0].mxu0 %v1398
    %v1475 = vpop.f32.mrb[0].mxu0
    %v1476 = vadd.f32 0.0, %v1475
    %v1477 = vpop.f32.mrb[0].mxu0
    %v1478 = vpop.f32.mrb[0].mxu0
    %v1479 = vadd.f32 0.0, %v1478
    %v1480 = vpop.f32.mrb[0].mxu0
    %1481 = vmatprep.mubr.bf16.mxu0 0
    %1482 = vmatmul.mubr.bf16.gmra.mrb[0].mxu0 %v1401
    %v1483 = vpop.f32.mrb[0].mxu0
    %v1484 = vadd.f32 0.0, %v1483
    %v1485 = vpop.f32.mrb[0].mxu0
    %v1486 = vpop.f32.mrb[0].mxu0
    %v1487 = vadd.f32 0.0, %v1486
    %v1488 = vpop.f32.mrb[0].mxu0
    %1489 = vmatprep.mubr.bf16.mxu0 0
    %1490 = vmatmul.mubr.bf16.gmra.mrb[0].mxu0 %v1404
    %v1491 = vpop.f32.mrb[0].mxu0
    %v1492 = vadd.f32 0.0, %v1491
    %v1493 = vpop.f32.mrb[0].mxu0
    %v1494 = vpop.f32.mrb[0].mxu0
    %v1495 = vadd.f32 0.0, %v1494
    %v1496 = vpop.f32.mrb[0].mxu0
    %1497 = vmatprep.mubr.bf16.mxu0 0
    %1498 = vmatmul.mubr.bf16.gmra.mrb[0].mxu0 %v1407
    %v1499 = vpop.f32.mrb[0].mxu0
    %v1500 = vadd.f32 0.0, %v1499
    %v1501 = vpop.f32.mrb[0].mxu0
    %v1502 = vpop.f32.mrb[0].mxu0
    %v1503 = vadd.f32 0.0, %v1502
    %v1504 = vpop.f32.mrb[0].mxu0
    %1505 = vdwg.mxu0
    %v1506 = vadd.f32 %v1328, %v1444
    %v1507 = vadd.f32 %v1329, %v1447
    %v1508 = vadd.f32 %v1330, %v1452
    %v1509 = vadd.f32 %v1331, %v1455
    %v1510 = vadd.f32 %v1332, %v1460
    %v1511 = vadd.f32 %v1333, %v1463
    %v1512 = vadd.f32 %v1334, %v1468
    %v1513 = vadd.f32 %v1335, %v1471
    %v1514 = vadd.f32 %v1336, %v1476
    %v1515 = vadd.f32 %v1337, %v1479
    %v1516 = vadd.f32 %v1338, %v1484
    %v1517 = vadd.f32 %v1339, %v1487
    %v1518 = vadd.f32 %v1340, %v1492
    %v1519 = vadd.f32 %v1341, %v1495
    %v1520 = vadd.f32 %v1342, %v1500
    %v1521 = vadd.f32 %v1343, %v1503
    %s1522 = scalar_lea.vmem [#allocation2], 32
    %v1523 = vld [vmem:[%s1522] sm:$0xff]
    %v1524 = vld [vmem:[%s1522 + $0x10] sm:$0xff]
    %v1525 = vld [vmem:[%s1522 + $0x20] sm:$0xff]
    %v1526 = vld [vmem:[%s1522 + $0x30] sm:$0xff]
    %v1527 = vld [vmem:[%s1522 + $0x40] sm:$0xff]
    %v1528 = vld [vmem:[%s1522 + $0x50] sm:$0xff]
    %v1529 = vld [vmem:[%s1522 + $0x60] sm:$0xff]
    %v1530 = vld [vmem:[%s1522 + $0x70] sm:$0xff]
    %v1531 = vld [vmem:[%s1522 + $0xa0] sm:$0xff]
    %v1532 = vld [vmem:[%s1522 + $0xb0] sm:$0xff]
    %v1533 = vld [vmem:[%s1522 + $0xc0] sm:$0xff]
    %v1534 = vld [vmem:[%s1522 + $0xd0] sm:$0xff]
    %v1535 = vld [vmem:[%s1522 + $0xe0] sm:$0xff]
    %v1536 = vld [vmem:[%s1522 + $0xf0] sm:$0xff]
    %v1537 = vld [vmem:[%s1522 + $0x100] sm:$0xff]
    %v1538 = vld [vmem:[%s1522 + $0x110] sm:$0xff]
    %v1539 = vpack.c.bf16 %v1524, %v1523
    %v1540 = vpack.c.bf16 %v1526, %v1525
    %v1541 = vpack.c.bf16 %v1528, %v1527
    %v1542 = vpack.c.bf16 %v1530, %v1529
    %v1543 = vpack.c.bf16 %v1532, %v1531
    %v1544 = vpack.c.bf16 %v1534, %v1533
    %v1545 = vpack.c.bf16 %v1536, %v1535
    %v1546 = vpack.c.bf16 %v1538, %v1537
    %s1547 = scalar_lea.vmem [#allocation8], 96
    %v1548 = vld [vmem:[%s1547] sm:$0xf]
    %v1549 = vld [vmem:[%s1547 + $0x4] sm:$0xf]
    %v1550 = vld [vmem:[%s1547 + $0x8] sm:$0xf]
    %v1551 = vld [vmem:[%s1547 + $0xc] sm:$0xf]
    %v1556 = vunpack.c.l.b16 %v1548
    %v1557 = vunpack.c.l.b16 %v1549
    %v1558 = vunpack.c.l.b16 %v1550
    %v1559 = vunpack.c.l.b16 %v1551
    %v1560 = vpack.c.b16 %v1557, %v1556
    %v1561 = vpack.c.b16 %v1559, %v1558
    %v1565 = vsel %vm118, %v1539, 0
    %v1568 = vsel %vm118, %v1540, 0
    %v1571 = vsel %vm118, %v1541, 0
    %v1574 = vsel %vm118, %v1542, 0
    %v1577 = vsel %vm118, %v1543, 0
    %v1580 = vsel %vm118, %v1544, 0
    %v1583 = vsel %vm118, %v1545, 0
    %v1586 = vsel %vm118, %v1546, 0
    %1588 = vmatprep.subr.bf16.mxu0 0
    %1589 = vmatpush1.bf16.msra.mxu0 %v1560
    %1590 = vmatprep.subr.bf16.mxu0 0
    %1591 = vmatpush1.bf16.msra.mxu0 %v1561
    %1592 = vmatprep.subr.bf16.mxu0 0
    %1593 = vmatpush1.bf16.msra.mxu0 0
    %1594 = vmatprep.subr.bf16.mxu0 0
    %1595 = vmatpush1.bf16.msra.mxu0 0
    %1596 = vmatprep.subr.bf16.mxu0 0
    %1597 = vmatpush1.bf16.msra.mxu0 0
    %1598 = vmatprep.subr.bf16.mxu0 0
    %1599 = vmatpush1.bf16.msra.mxu0 0
    %1600 = vmatprep.subr.bf16.mxu0 0
    %1601 = vmatpush1.bf16.msra.mxu0 0
    %1602 = vmatprep.subr.bf16.mxu0 0
    %1603 = vmatpush1.bf16.msra.mxu0 0
    %1604 = vmatprep.subr.bf16.mxu0 0
    %1605 = vmatpush1.bf16.msra.mxu0 0
    %1606 = vmatprep.subr.bf16.mxu0 0
    %1607 = vmatpush1.bf16.msra.mxu0 0
    %1608 = vmatprep.subr.bf16.mxu0 0
    %1609 = vmatpush1.bf16.msra.mxu0 0
    %1610 = vmatprep.subr.bf16.mxu0 0
    %1611 = vmatpush1.bf16.msra.mxu0 0
    %1612 = vmatprep.subr.bf16.mxu0 0
    %1613 = vmatpush1.bf16.msra.mxu0 0
    %1614 = vmatprep.subr.bf16.mxu0 0
    %1615 = vmatpush1.bf16.msra.mxu0 0
    %1616 = vmatprep.subr.bf16.mxu0 0
    %1617 = vmatpush1.bf16.msra.mxu0 0
    %1618 = vmatprep.subr.bf16.mxu0 0
    %1619 = vmatpush1.bf16.msra.mxu0 0
    %1620 = vmatprep.mubr.bf16.mxu0 0
    %1621 = vmatmul.mubr.bf16.gmra.mrb[0].mxu0 %v1565
    %v1622 = vpop.f32.mrb[0].mxu0
    %v1623 = vadd.f32 0.0, %v1622
    %v1624 = vpop.f32.mrb[0].mxu0
    %v1625 = vpop.f32.mrb[0].mxu0
    %v1626 = vadd.f32 0.0, %v1625
    %v1627 = vpop.f32.mrb[0].mxu0
    %1628 = vmatprep.mubr.bf16.mxu0 0
    %1629 = vmatmul.mubr.bf16.gmra.mrb[0].mxu0 %v1568
    %v1630 = vpop.f32.mrb[0].mxu0
    %v1631 = vadd.f32 0.0, %v1630
    %v1632 = vpop.f32.mrb[0].mxu0
    %v1633 = vpop.f32.mrb[0].mxu0
    %v1634 = vadd.f32 0.0, %v1633
    %v1635 = vpop.f32.mrb[0].mxu0
    %1636 = vmatprep.mubr.bf16.mxu0 0
    %1637 = vmatmul.mubr.bf16.gmra.mrb[0].mxu0 %v1571
    %v1638 = vpop.f32.mrb[0].mxu0
    %v1639 = vadd.f32 0.0, %v1638
    %v1640 = vpop.f32.mrb[0].mxu0
    %v1641 = vpop.f32.mrb[0].mxu0
    %v1642 = vadd.f32 0.0, %v1641
    %v1643 = vpop.f32.mrb[0].mxu0
    %1644 = vmatprep.mubr.bf16.mxu0 0
    %1645 = vmatmul.mubr.bf16.gmra.mrb[0].mxu0 %v1574
    %v1646 = vpop.f32.mrb[0].mxu0
    %v1647 = vadd.f32 0.0, %v1646
    %v1648 = vpop.f32.mrb[0].mxu0
    %v1649 = vpop.f32.mrb[0].mxu0
    %v1650 = vadd.f32 0.0, %v1649
    %v1651 = vpop.f32.mrb[0].mxu0
    %1652 = vmatprep.mubr.bf16.mxu0 0
    %1653 = vmatmul.mubr.bf16.gmra.mrb[0].mxu0 %v1577
    %v1654 = vpop.f32.mrb[0].mxu0
    %v1655 = vadd.f32 0.0, %v1654
    %v1656 = vpop.f32.mrb[0].mxu0
    %v1657 = vpop.f32.mrb[0].mxu0
    %v1658 = vadd.f32 0.0, %v1657
    %v1659 = vpop.f32.mrb[0].mxu0
    %1660 = vmatprep.mubr.bf16.mxu0 0
    %1661 = vmatmul.mubr.bf16.gmra.mrb[0].mxu0 %v1580
    %v1662 = vpop.f32.mrb[0].mxu0
    %v1663 = vadd.f32 0.0, %v1662
    %v1664 = vpop.f32.mrb[0].mxu0
    %v1665 = vpop.f32.mrb[0].mxu0
    %v1666 = vadd.f32 0.0, %v1665
    %v1667 = vpop.f32.mrb[0].mxu0
    %1668 = vmatprep.mubr.bf16.mxu0 0
    %1669 = vmatmul.mubr.bf16.gmra.mrb[0].mxu0 %v1583
    %v1670 = vpop.f32.mrb[0].mxu0
    %v1671 = vadd.f32 0.0, %v1670
    %v1672 = vpop.f32.mrb[0].mxu0
    %v1673 = vpop.f32.mrb[0].mxu0
    %v1674 = vadd.f32 0.0, %v1673
    %v1675 = vpop.f32.mrb[0].mxu0
    %1676 = vmatprep.mubr.bf16.mxu0 0
    %1677 = vmatmul.mubr.bf16.gmra.mrb[0].mxu0 %v1586
    %v1678 = vpop.f32.mrb[0].mxu0
    %v1679 = vadd.f32 0.0, %v1678
    %v1680 = vpop.f32.mrb[0].mxu0
    %v1681 = vpop.f32.mrb[0].mxu0
    %v1682 = vadd.f32 0.0, %v1681
    %v1683 = vpop.f32.mrb[0].mxu0
    %1684 = vdwg.mxu0
    %v1685 = vadd.f32 %v1506, %v1623
    %v1686 = vadd.f32 %v1507, %v1626
    %v1687 = vadd.f32 %v1508, %v1631
    %v1688 = vadd.f32 %v1509, %v1634
    %v1689 = vadd.f32 %v1510, %v1639
    %v1690 = vadd.f32 %v1511, %v1642
    %v1691 = vadd.f32 %v1512, %v1647
    %v1692 = vadd.f32 %v1513, %v1650
    %v1693 = vadd.f32 %v1514, %v1655
    %v1694 = vadd.f32 %v1515, %v1658
    %v1695 = vadd.f32 %v1516, %v1663
    %v1696 = vadd.f32 %v1517, %v1666
    %v1697 = vadd.f32 %v1518, %v1671
    %v1698 = vadd.f32 %v1519, %v1674
    %v1699 = vadd.f32 %v1520, %v1679
    %v1700 = vadd.f32 %v1521, %v1682
    %v1701 = vld [vmem:[%s1522 + $0x1] sm:$0xff]
    %v1702 = vld [vmem:[%s1522 + $0x11] sm:$0xff]
    %v1703 = vld [vmem:[%s1522 + $0x21] sm:$0xff]
    %v1704 = vld [vmem:[%s1522 + $0x31] sm:$0xff]
    %v1705 = vld [vmem:[%s1522 + $0x41] sm:$0xff]
    %v1706 = vld [vmem:[%s1522 + $0x51] sm:$0xff]
    %v1707 = vld [vmem:[%s1522 + $0x61] sm:$0xff]
    %v1708 = vld [vmem:[%s1522 + $0x71] sm:$0xff]
    %v1709 = vld [vmem:[%s1522 + $0xa1] sm:$0xff]
    %v1710 = vld [vmem:[%s1522 + $0xb1] sm:$0xff]
    %v1711 = vld [vmem:[%s1522 + $0xc1] sm:$0xff]
    %v1712 = vld [vmem:[%s1522 + $0xd1] sm:$0xff]
    %v1713 = vld [vmem:[%s1522 + $0xe1] sm:$0xff]
    %v1714 = vld [vmem:[%s1522 + $0xf1] sm:$0xff]
    %v1715 = vld [vmem:[%s1522 + $0x101] sm:$0xff]
    %v1716 = vld [vmem:[%s1522 + $0x111] sm:$0xff]
    %v1717 = vpack.c.bf16 %v1702, %v1701
    %v1718 = vpack.c.bf16 %v1704, %v1703
    %v1719 = vpack.c.bf16 %v1706, %v1705
    %v1720 = vpack.c.bf16 %v1708, %v1707
    %v1721 = vpack.c.bf16 %v1710, %v1709
    %v1722 = vpack.c.bf16 %v1712, %v1711
    %v1723 = vpack.c.bf16 %v1714, %v1713
    %v1724 = vpack.c.bf16 %v1716, %v1715
    %s1725 = scalar_lea.vmem [#allocation8], 112
    %v1726 = vld [vmem:[%s1725] sm:$0xf]
    %v1727 = vld [vmem:[%s1725 + $0x4] sm:$0xf]
    %v1728 = vld [vmem:[%s1725 + $0x8] sm:$0xf]
    %v1729 = vld [vmem:[%s1725 + $0xc] sm:$0xf]
    %v1734 = vunpack.c.l.b16 %v1726
    %v1735 = vunpack.c.l.b16 %v1727
    %v1736 = vunpack.c.l.b16 %v1728
    %v1737 = vunpack.c.l.b16 %v1729
    %v1738 = vpack.c.b16 %v1735, %v1734
    %v1739 = vpack.c.b16 %v1737, %v1736
    %v1743 = vsel %vm118, %v1717, 0
    %v1746 = vsel %vm118, %v1718, 0
    %v1749 = vsel %vm118, %v1719, 0
    %v1752 = vsel %vm118, %v1720, 0
    %v1755 = vsel %vm118, %v1721, 0
    %v1758 = vsel %vm118, %v1722, 0
    %v1761 = vsel %vm118, %v1723, 0
    %v1764 = vsel %vm118, %v1724, 0
    %1766 = vmatprep.subr.bf16.mxu0 0
    %1767 = vmatpush1.bf16.msra.mxu0 %v1738
    %1768 = vmatprep.subr.bf16.mxu0 0
    %1769 = vmatpush1.bf16.msra.mxu0 %v1739
    %1770 = vmatprep.subr.bf16.mxu0 0
    %1771 = vmatpush1.bf16.msra.mxu0 0
    %1772 = vmatprep.subr.bf16.mxu0 0
    %1773 = vmatpush1.bf16.msra.mxu0 0
    %1774 = vmatprep.subr.bf16.mxu0 0
    %1775 = vmatpush1.bf16.msra.mxu0 0
    %1776 = vmatprep.subr.bf16.mxu0 0
    %1777 = vmatpush1.bf16.msra.mxu0 0
    %1778 = vmatprep.subr.bf16.mxu0 0
    %1779 = vmatpush1.bf16.msra.mxu0 0
    %1780 = vmatprep.subr.bf16.mxu0 0
    %1781 = vmatpush1.bf16.msra.mxu0 0
    %1782 = vmatprep.subr.bf16.mxu0 0
    %1783 = vmatpush1.bf16.msra.mxu0 0
    %1784 = vmatprep.subr.bf16.mxu0 0
    %1785 = vmatpush1.bf16.msra.mxu0 0
    %1786 = vmatprep.subr.bf16.mxu0 0
    %1787 = vmatpush1.bf16.msra.mxu0 0
    %1788 = vmatprep.subr.bf16.mxu0 0
    %1789 = vmatpush1.bf16.msra.mxu0 0
    %1790 = vmatprep.subr.bf16.mxu0 0
    %1791 = vmatpush1.bf16.msra.mxu0 0
    %1792 = vmatprep.subr.bf16.mxu0 0
    %1793 = vmatpush1.bf16.msra.mxu0 0
    %1794 = vmatprep.subr.bf16.mxu0 0
    %1795 = vmatpush1.bf16.msra.mxu0 0
    %1796 = vmatprep.subr.bf16.mxu0 0
    %1797 = vmatpush1.bf16.msra.mxu0 0
    %1798 = vmatprep.mubr.bf16.mxu0 0
    %1799 = vmatmul.mubr.bf16.gmra.mrb[0].mxu0 %v1743
    %v1800 = vpop.f32.mrb[0].mxu0
    %v1801 = vadd.f32 0.0, %v1800
    %v1802 = vpop.f32.mrb[0].mxu0
    %v1803 = vpop.f32.mrb[0].mxu0
    %v1804 = vadd.f32 0.0, %v1803
    %v1805 = vpop.f32.mrb[0].mxu0
    %1806 = vmatprep.mubr.bf16.mxu0 0
    %1807 = vmatmul.mubr.bf16.gmra.mrb[0].mxu0 %v1746
    %v1808 = vpop.f32.mrb[0].mxu0
    %v1809 = vadd.f32 0.0, %v1808
    %v1810 = vpop.f32.mrb[0].mxu0
    %v1811 = vpop.f32.mrb[0].mxu0
    %v1812 = vadd.f32 0.0, %v1811
    %v1813 = vpop.f32.mrb[0].mxu0
    %1814 = vmatprep.mubr.bf16.mxu0 0
    %1815 = vmatmul.mubr.bf16.gmra.mrb[0].mxu0 %v1749
    %v1816 = vpop.f32.mrb[0].mxu0
    %v1817 = vadd.f32 0.0, %v1816
    %v1818 = vpop.f32.mrb[0].mxu0
    %v1819 = vpop.f32.mrb[0].mxu0
    %v1820 = vadd.f32 0.0, %v1819
    %v1821 = vpop.f32.mrb[0].mxu0
    %1822 = vmatprep.mubr.bf16.mxu0 0
    %1823 = vmatmul.mubr.bf16.gmra.mrb[0].mxu0 %v1752
    %v1824 = vpop.f32.mrb[0].mxu0
    %v1825 = vadd.f32 0.0, %v1824
    %v1826 = vpop.f32.mrb[0].mxu0
    %v1827 = vpop.f32.mrb[0].mxu0
    %v1828 = vadd.f32 0.0, %v1827
    %v1829 = vpop.f32.mrb[0].mxu0
    %1830 = vmatprep.mubr.bf16.mxu0 0
    %1831 = vmatmul.mubr.bf16.gmra.mrb[0].mxu0 %v1755
    %v1832 = vpop.f32.mrb[0].mxu0
    %v1833 = vadd.f32 0.0, %v1832
    %v1834 = vpop.f32.mrb[0].mxu0
    %v1835 = vpop.f32.mrb[0].mxu0
    %v1836 = vadd.f32 0.0, %v1835
    %v1837 = vpop.f32.mrb[0].mxu0
    %1838 = vmatprep.mubr.bf16.mxu0 0
    %1839 = vmatmul.mubr.bf16.gmra.mrb[0].mxu0 %v1758
    %v1840 = vpop.f32.mrb[0].mxu0
    %v1841 = vadd.f32 0.0, %v1840
    %v1842 = vpop.f32.mrb[0].mxu0
    %v1843 = vpop.f32.mrb[0].mxu0
    %v1844 = vadd.f32 0.0, %v1843
    %v1845 = vpop.f32.mrb[0].mxu0
    %1846 = vmatprep.mubr.bf16.mxu0 0
    %1847 = vmatmul.mubr.bf16.gmra.mrb[0].mxu0 %v1761
    %v1848 = vpop.f32.mrb[0].mxu0
    %v1849 = vadd.f32 0.0, %v1848
    %v1850 = vpop.f32.mrb[0].mxu0
    %v1851 = vpop.f32.mrb[0].mxu0
    %v1852 = vadd.f32 0.0, %v1851
    %v1853 = vpop.f32.mrb[0].mxu0
    %1854 = vmatprep.mubr.bf16.mxu0 0
    %1855 = vmatmul.mubr.bf16.gmra.mrb[0].mxu0 %v1764
    %v1856 = vpop.f32.mrb[0].mxu0
    %v1857 = vadd.f32 0.0, %v1856
    %v1858 = vpop.f32.mrb[0].mxu0
    %v1859 = vpop.f32.mrb[0].mxu0
    %v1860 = vadd.f32 0.0, %v1859
    %v1861 = vpop.f32.mrb[0].mxu0
    %1862 = vdwg.mxu0
    %v1863 = vadd.f32 %v1685, %v1801
    %v1864 = vadd.f32 %v1686, %v1804
    %v1865 = vadd.f32 %v1687, %v1809
    %v1866 = vadd.f32 %v1688, %v1812
    %v1867 = vadd.f32 %v1689, %v1817
    %v1868 = vadd.f32 %v1690, %v1820
    %v1869 = vadd.f32 %v1691, %v1825
    %v1870 = vadd.f32 %v1692, %v1828
    %v1871 = vadd.f32 %v1693, %v1833
    %v1872 = vadd.f32 %v1694, %v1836
    %v1873 = vadd.f32 %v1695, %v1841
    %v1874 = vadd.f32 %v1696, %v1844
    %v1875 = vadd.f32 %v1697, %v1849
    %v1876 = vadd.f32 %v1698, %v1852
    %v1877 = vadd.f32 %v1699, %v1857
    %v1878 = vadd.f32 %v1700, %v1860
    %v1879 = vld [vmem:[%s1522 + $0x2] sm:$0xff]
    %v1880 = vld [vmem:[%s1522 + $0x12] sm:$0xff]
    %v1881 = vld [vmem:[%s1522 + $0x22] sm:$0xff]
    %v1882 = vld [vmem:[%s1522 + $0x32] sm:$0xff]
    %v1883 = vld [vmem:[%s1522 + $0x42] sm:$0xff]
    %v1884 = vld [vmem:[%s1522 + $0x52] sm:$0xff]
    %v1885 = vld [vmem:[%s1522 + $0x62] sm:$0xff]
    %v1886 = vld [vmem:[%s1522 + $0x72] sm:$0xff]
    %v1887 = vld [vmem:[%s1522 + $0xa2] sm:$0xff]
    %v1888 = vld [vmem:[%s1522 + $0xb2] sm:$0xff]
    %v1889 = vld [vmem:[%s1522 + $0xc2] sm:$0xff]
    %v1890 = vld [vmem:[%s1522 + $0xd2] sm:$0xff]
    %v1891 = vld [vmem:[%s1522 + $0xe2] sm:$0xff]
    %v1892 = vld [vmem:[%s1522 + $0xf2] sm:$0xff]
    %v1893 = vld [vmem:[%s1522 + $0x102] sm:$0xff]
    %v1894 = vld [vmem:[%s1522 + $0x112] sm:$0xff]
    %v1895 = vpack.c.bf16 %v1880, %v1879
    %v1896 = vpack.c.bf16 %v1882, %v1881
    %v1897 = vpack.c.bf16 %v1884, %v1883
    %v1898 = vpack.c.bf16 %v1886, %v1885
    %v1899 = vpack.c.bf16 %v1888, %v1887
    %v1900 = vpack.c.bf16 %v1890, %v1889
    %v1901 = vpack.c.bf16 %v1892, %v1891
    %v1902 = vpack.c.bf16 %v1894, %v1893
    %s1903 = scalar_lea.vmem [#allocation8], 128
    %v1904 = vld [vmem:[%s1903] sm:$0xf]
    %v1905 = vld [vmem:[%s1903 + $0x4] sm:$0xf]
    %v1906 = vld [vmem:[%s1903 + $0x8] sm:$0xf]
    %v1907 = vld [vmem:[%s1903 + $0xc] sm:$0xf]
    %v1912 = vunpack.c.l.b16 %v1904
    %v1913 = vunpack.c.l.b16 %v1905
    %v1914 = vunpack.c.l.b16 %v1906
    %v1915 = vunpack.c.l.b16 %v1907
    %v1916 = vpack.c.b16 %v1913, %v1912
    %v1917 = vpack.c.b16 %v1915, %v1914
    %v1921 = vsel %vm118, %v1895, 0
    %v1924 = vsel %vm118, %v1896, 0
    %v1927 = vsel %vm118, %v1897, 0
    %v1930 = vsel %vm118, %v1898, 0
    %v1933 = vsel %vm118, %v1899, 0
    %v1936 = vsel %vm118, %v1900, 0
    %v1939 = vsel %vm118, %v1901, 0
    %v1942 = vsel %vm118, %v1902, 0
    %1944 = vmatprep.subr.bf16.mxu0 0
    %1945 = vmatpush1.bf16.msra.mxu0 %v1916
    %1946 = vmatprep.subr.bf16.mxu0 0
    %1947 = vmatpush1.bf16.msra.mxu0 %v1917
    %1948 = vmatprep.subr.bf16.mxu0 0
    %1949 = vmatpush1.bf16.msra.mxu0 0
    %1950 = vmatprep.subr.bf16.mxu0 0
    %1951 = vmatpush1.bf16.msra.mxu0 0
    %1952 = vmatprep.subr.bf16.mxu0 0
    %1953 = vmatpush1.bf16.msra.mxu0 0
    %1954 = vmatprep.subr.bf16.mxu0 0
    %1955 = vmatpush1.bf16.msra.mxu0 0
    %1956 = vmatprep.subr.bf16.mxu0 0
    %1957 = vmatpush1.bf16.msra.mxu0 0
    %1958 = vmatprep.subr.bf16.mxu0 0
    %1959 = vmatpush1.bf16.msra.mxu0 0
    %1960 = vmatprep.subr.bf16.mxu0 0
    %1961 = vmatpush1.bf16.msra.mxu0 0
    %1962 = vmatprep.subr.bf16.mxu0 0
    %1963 = vmatpush1.bf16.msra.mxu0 0
    %1964 = vmatprep.subr.bf16.mxu0 0
    %1965 = vmatpush1.bf16.msra.mxu0 0
    %1966 = vmatprep.subr.bf16.mxu0 0
    %1967 = vmatpush1.bf16.msra.mxu0 0
    %1968 = vmatprep.subr.bf16.mxu0 0
    %1969 = vmatpush1.bf16.msra.mxu0 0
    %1970 = vmatprep.subr.bf16.mxu0 0
    %1971 = vmatpush1.bf16.msra.mxu0 0
    %1972 = vmatprep.subr.bf16.mxu0 0
    %1973 = vmatpush1.bf16.msra.mxu0 0
    %1974 = vmatprep.subr.bf16.mxu0 0
    %1975 = vmatpush1.bf16.msra.mxu0 0
    %1976 = vmatprep.mubr.bf16.mxu0 0
    %1977 = vmatmul.mubr.bf16.gmra.mrb[0].mxu0 %v1921
    %v1978 = vpop.f32.mrb[0].mxu0
    %v1979 = vadd.f32 0.0, %v1978
    %v1980 = vpop.f32.mrb[0].mxu0
    %v1981 = vpop.f32.mrb[0].mxu0
    %v1982 = vadd.f32 0.0, %v1981
    %v1983 = vpop.f32.mrb[0].mxu0
    %1984 = vmatprep.mubr.bf16.mxu0 0
    %1985 = vmatmul.mubr.bf16.gmra.mrb[0].mxu0 %v1924
    %v1986 = vpop.f32.mrb[0].mxu0
    %v1987 = vadd.f32 0.0, %v1986
    %v1988 = vpop.f32.mrb[0].mxu0
    %v1989 = vpop.f32.mrb[0].mxu0
    %v1990 = vadd.f32 0.0, %v1989
    %v1991 = vpop.f32.mrb[0].mxu0
    %1992 = vmatprep.mubr.bf16.mxu0 0
    %1993 = vmatmul.mubr.bf16.gmra.mrb[0].mxu0 %v1927
    %v1994 = vpop.f32.mrb[0].mxu0
    %v1995 = vadd.f32 0.0, %v1994
    %v1996 = vpop.f32.mrb[0].mxu0
    %v1997 = vpop.f32.mrb[0].mxu0
    %v1998 = vadd.f32 0.0, %v1997
    %v1999 = vpop.f32.mrb[0].mxu0
    %2000 = vmatprep.mubr.bf16.mxu0 0
    %2001 = vmatmul.mubr.bf16.gmra.mrb[0].mxu0 %v1930
    %v2002 = vpop.f32.mrb[0].mxu0
    %v2003 = vadd.f32 0.0, %v2002
    %v2004 = vpop.f32.mrb[0].mxu0
    %v2005 = vpop.f32.mrb[0].mxu0
    %v2006 = vadd.f32 0.0, %v2005
    %v2007 = vpop.f32.mrb[0].mxu0
    %2008 = vmatprep.mubr.bf16.mxu0 0
    %2009 = vmatmul.mubr.bf16.gmra.mrb[0].mxu0 %v1933
    %v2010 = vpop.f32.mrb[0].mxu0
    %v2011 = vadd.f32 0.0, %v2010
    %v2012 = vpop.f32.mrb[0].mxu0
    %v2013 = vpop.f32.mrb[0].mxu0
    %v2014 = vadd.f32 0.0, %v2013
    %v2015 = vpop.f32.mrb[0].mxu0
    %2016 = vmatprep.mubr.bf16.mxu0 0
    %2017 = vmatmul.mubr.bf16.gmra.mrb[0].mxu0 %v1936
    %v2018 = vpop.f32.mrb[0].mxu0
    %v2019 = vadd.f32 0.0, %v2018
    %v2020 = vpop.f32.mrb[0].mxu0
    %v2021 = vpop.f32.mrb[0].mxu0
    %v2022 = vadd.f32 0.0, %v2021
    %v2023 = vpop.f32.mrb[0].mxu0
    %2024 = vmatprep.mubr.bf16.mxu0 0
    %2025 = vmatmul.mubr.bf16.gmra.mrb[0].mxu0 %v1939
    %v2026 = vpop.f32.mrb[0].mxu0
    %v2027 = vadd.f32 0.0, %v2026
    %v2028 = vpop.f32.mrb[0].mxu0
    %v2029 = vpop.f32.mrb[0].mxu0
    %v2030 = vadd.f32 0.0, %v2029
    %v2031 = vpop.f32.mrb[0].mxu0
    %2032 = vmatprep.mubr.bf16.mxu0 0
    %2033 = vmatmul.mubr.bf16.gmra.mrb[0].mxu0 %v1942
    %v2034 = vpop.f32.mrb[0].mxu0
    %v2035 = vadd.f32 0.0, %v2034
    %v2036 = vpop.f32.mrb[0].mxu0
    %v2037 = vpop.f32.mrb[0].mxu0
    %v2038 = vadd.f32 0.0, %v2037
    %v2039 = vpop.f32.mrb[0].mxu0
    %2040 = vdwg.mxu0
    %v2041 = vadd.f32 %v1863, %v1979
    %v2042 = vadd.f32 %v1864, %v1982
    %v2043 = vadd.f32 %v1865, %v1987
    %v2044 = vadd.f32 %v1866, %v1990
    %v2045 = vadd.f32 %v1867, %v1995
    %v2046 = vadd.f32 %v1868, %v1998
    %v2047 = vadd.f32 %v1869, %v2003
    %v2048 = vadd.f32 %v1870, %v2006
    %v2049 = vadd.f32 %v1871, %v2011
    %v2050 = vadd.f32 %v1872, %v2014
    %v2051 = vadd.f32 %v1873, %v2019
    %v2052 = vadd.f32 %v1874, %v2022
    %v2053 = vadd.f32 %v1875, %v2027
    %v2054 = vadd.f32 %v1876, %v2030
    %v2055 = vadd.f32 %v1877, %v2035
    %v2056 = vadd.f32 %v1878, %v2038
    %v2057 = vld [vmem:[%s5] sm:$0x1]
    %v2058 = vld [vmem:[%s6] sm:$0x1]
    %v2059 = vsel %vm118, %v2041, 0.0
    %v2060 = vsel %vm118, %v2042, 0.0
    %v2061 = vadd.f32 %v2059, %v2060
    %v2062 = vsel %vm118, %v2043, 0.0
    %v2063 = vadd.f32 %v2061, %v2062
    %v2064 = vsel %vm118, %v2044, 0.0
    %v2065 = vadd.f32 %v2063, %v2064
    %v2066 = vsel %vm118, %v2045, 0.0
    %v2067 = vadd.f32 %v2065, %v2066
    %v2068 = vsel %vm118, %v2046, 0.0
    %v2069 = vadd.f32 %v2067, %v2068
    %v2070 = vsel %vm118, %v2047, 0.0
    %v2071 = vadd.f32 %v2069, %v2070
    %v2072 = vsel %vm118, %v2048, 0.0
    %v2073 = vadd.f32 %v2071, %v2072
    %v2074 = vsel %vm118, %v2049, 0.0
    %v2075 = vadd.f32 %v2073, %v2074
    %v2076 = vsel %vm118, %v2050, 0.0
    %v2077 = vadd.f32 %v2075, %v2076
    %v2078 = vsel %vm118, %v2051, 0.0
    %v2079 = vadd.f32 %v2077, %v2078
    %v2080 = vsel %vm118, %v2052, 0.0
    %v2081 = vadd.f32 %v2079, %v2080
    %v2082 = vsel %vm118, %v2053, 0.0
    %v2083 = vadd.f32 %v2081, %v2082
    %v2084 = vsel %vm118, %v2054, 0.0
    %v2085 = vadd.f32 %v2083, %v2084
    %v2086 = vsel %vm118, %v2055, 0.0
    %v2087 = vadd.f32 %v2085, %v2086
    %v2088 = vsel %vm118, %v2056, 0.0
    %v2089 = vadd.f32 %v2087, %v2088
    %v2090 = vrot.slane %v2089, 4
    %v2091 = vadd.f32 %v2089, %v2090
    %v2092 = vrot.slane %v2091, 2
    %v2093 = vadd.f32 %v2091, %v2092
    %v2094 = vrot.slane %v2093, 1
    %v2095 = vadd.f32 %v2093, %v2094
    %v2096 = vmul.f32 %v2095, %v279
    %v2097 = vsub.f32 %v2041, %v2096
    %v2098 = vsub.f32 %v2042, %v2096
    %v2099 = vsub.f32 %v2043, %v2096
    %v2100 = vsub.f32 %v2044, %v2096
    %v2101 = vsub.f32 %v2045, %v2096
    %v2102 = vsub.f32 %v2046, %v2096
    %v2103 = vsub.f32 %v2047, %v2096
    %v2104 = vsub.f32 %v2048, %v2096
    %v2105 = vsub.f32 %v2049, %v2096
    %v2106 = vsub.f32 %v2050, %v2096
    %v2107 = vsub.f32 %v2051, %v2096
    %v2108 = vsub.f32 %v2052, %v2096
    %v2109 = vsub.f32 %v2053, %v2096
    %v2110 = vsub.f32 %v2054, %v2096
    %v2111 = vsub.f32 %v2055, %v2096
    %v2112 = vsub.f32 %v2056, %v2096
    %v2113 = vmul.f32 %v2097, %v2097
    %v2114 = vmul.f32 %v2098, %v2098
    %v2115 = vmul.f32 %v2099, %v2099
    %v2116 = vmul.f32 %v2100, %v2100
    %v2117 = vmul.f32 %v2101, %v2101
    %v2118 = vmul.f32 %v2102, %v2102
    %v2119 = vmul.f32 %v2103, %v2103
    %v2120 = vmul.f32 %v2104, %v2104
    %v2121 = vmul.f32 %v2105, %v2105
    %v2122 = vmul.f32 %v2106, %v2106
    %v2123 = vmul.f32 %v2107, %v2107
    %v2124 = vmul.f32 %v2108, %v2108
    %v2125 = vmul.f32 %v2109, %v2109
    %v2126 = vmul.f32 %v2110, %v2110
    %v2127 = vmul.f32 %v2111, %v2111
    %v2128 = vmul.f32 %v2112, %v2112
    %v2129 = vsel %vm118, %v2113, 0.0
    %v2130 = vsel %vm118, %v2114, 0.0
    %v2131 = vadd.f32 %v2129, %v2130
    %v2132 = vsel %vm118, %v2115, 0.0
    %v2133 = vadd.f32 %v2131, %v2132
    %v2134 = vsel %vm118, %v2116, 0.0
    %v2135 = vadd.f32 %v2133, %v2134
    %v2136 = vsel %vm118, %v2117, 0.0
    %v2137 = vadd.f32 %v2135, %v2136
    %v2138 = vsel %vm118, %v2118, 0.0
    %v2139 = vadd.f32 %v2137, %v2138
    %v2140 = vsel %vm118, %v2119, 0.0
    %v2141 = vadd.f32 %v2139, %v2140
    %v2142 = vsel %vm118, %v2120, 0.0
    %v2143 = vadd.f32 %v2141, %v2142
    %v2144 = vsel %vm118, %v2121, 0.0
    %v2145 = vadd.f32 %v2143, %v2144
    %v2146 = vsel %vm118, %v2122, 0.0
    %v2147 = vadd.f32 %v2145, %v2146
    %v2148 = vsel %vm118, %v2123, 0.0
    %v2149 = vadd.f32 %v2147, %v2148
    %v2150 = vsel %vm118, %v2124, 0.0
    %v2151 = vadd.f32 %v2149, %v2150
    %v2152 = vsel %vm118, %v2125, 0.0
    %v2153 = vadd.f32 %v2151, %v2152
    %v2154 = vsel %vm118, %v2126, 0.0
    %v2155 = vadd.f32 %v2153, %v2154
    %v2156 = vsel %vm118, %v2127, 0.0
    %v2157 = vadd.f32 %v2155, %v2156
    %v2158 = vsel %vm118, %v2128, 0.0
    %v2159 = vadd.f32 %v2157, %v2158
    %v2160 = vrot.slane %v2159, 4
    %v2161 = vadd.f32 %v2159, %v2160
    %v2162 = vrot.slane %v2161, 2
    %v2163 = vadd.f32 %v2161, %v2162
    %v2164 = vrot.slane %v2163, 1
    %v2165 = vadd.f32 %v2163, %v2164
    %v2166 = vmul.f32 %v2165, %v279
    %v2167 = vadd.f32 %v2166, 1e-05
    %v2168 = vrsqrt.pop %v2167
    %v2169 = vmul.f32 %v2097, %v2168
    %v2170 = vmul.f32 %v2098, %v2168
    %v2171 = vmul.f32 %v2099, %v2168
    %v2172 = vmul.f32 %v2100, %v2168
    %v2173 = vmul.f32 %v2101, %v2168
    %v2174 = vmul.f32 %v2102, %v2168
    %v2175 = vmul.f32 %v2103, %v2168
    %v2176 = vmul.f32 %v2104, %v2168
    %v2177 = vmul.f32 %v2105, %v2168
    %v2178 = vmul.f32 %v2106, %v2168
    %v2179 = vmul.f32 %v2107, %v2168
    %v2180 = vmul.f32 %v2108, %v2168
    %v2181 = vmul.f32 %v2109, %v2168
    %v2182 = vmul.f32 %v2110, %v2168
    %v2183 = vmul.f32 %v2111, %v2168
    %v2184 = vmul.f32 %v2112, %v2168
    %v2186 = vlaneseq
    %v2187 = vshrl.u32 %v2186, 7
    %v2188 = vsub.s32 0, %v2187
    %v2189 = vrot.slane %v2057, %v2188
    %v2191 = vmul.f32 %v2169, %v2189
    %v2192 = vmul.f32 %v2170, %v2189
    %v2193 = vmul.f32 %v2171, %v2189
    %v2194 = vmul.f32 %v2172, %v2189
    %v2195 = vmul.f32 %v2173, %v2189
    %v2196 = vmul.f32 %v2174, %v2189
    %v2197 = vmul.f32 %v2175, %v2189
    %v2198 = vmul.f32 %v2176, %v2189
    %v2199 = vmul.f32 %v2177, %v2189
    %v2200 = vmul.f32 %v2178, %v2189
    %v2201 = vmul.f32 %v2179, %v2189
    %v2202 = vmul.f32 %v2180, %v2189
    %v2203 = vmul.f32 %v2181, %v2189
    %v2204 = vmul.f32 %v2182, %v2189
    %v2205 = vmul.f32 %v2183, %v2189
    %v2206 = vmul.f32 %v2184, %v2189
    %v2208 = vlaneseq
    %v2209 = vshrl.u32 %v2208, 7
    %v2210 = vsub.s32 0, %v2209
    %v2211 = vrot.slane %v2058, %v2210
    %v2213 = vadd.f32 %v2191, %v2211
    %v2214 = vadd.f32 %v2192, %v2211
    %v2215 = vadd.f32 %v2193, %v2211
    %v2216 = vadd.f32 %v2194, %v2211
    %v2217 = vadd.f32 %v2195, %v2211
    %v2218 = vadd.f32 %v2196, %v2211
    %v2219 = vadd.f32 %v2197, %v2211
    %v2220 = vadd.f32 %v2198, %v2211
    %v2221 = vadd.f32 %v2199, %v2211
    %v2222 = vadd.f32 %v2200, %v2211
    %v2223 = vadd.f32 %v2201, %v2211
    %v2224 = vadd.f32 %v2202, %v2211
    %v2225 = vadd.f32 %v2203, %v2211
    %v2226 = vadd.f32 %v2204, %v2211
    %v2227 = vadd.f32 %v2205, %v2211
    %v2228 = vadd.f32 %v2206, %v2211
    %v2229 = vmax.f32 %v2213, 0.0
    %v2230 = vmax.f32 %v2214, 0.0
    %v2231 = vmax.f32 %v2215, 0.0
    %v2232 = vmax.f32 %v2216, 0.0
    %v2233 = vmax.f32 %v2217, 0.0
    %v2234 = vmax.f32 %v2218, 0.0
    %v2235 = vmax.f32 %v2219, 0.0
    %v2236 = vmax.f32 %v2220, 0.0
    %v2237 = vmax.f32 %v2221, 0.0
    %v2238 = vmax.f32 %v2222, 0.0
    %v2239 = vmax.f32 %v2223, 0.0
    %v2240 = vmax.f32 %v2224, 0.0
    %v2241 = vmax.f32 %v2225, 0.0
    %v2242 = vmax.f32 %v2226, 0.0
    %v2243 = vmax.f32 %v2227, 0.0
    %v2244 = vmax.f32 %v2228, 0.0
    %v2245 = vpack.c.bf16 %v2230, %v2229
    %v2246 = vpack.c.bf16 %v2232, %v2231
    %v2247 = vpack.c.bf16 %v2234, %v2233
    %v2248 = vpack.c.bf16 %v2236, %v2235
    %v2249 = vpack.c.bf16 %v2238, %v2237
    %v2250 = vpack.c.bf16 %v2240, %v2239
    %v2251 = vpack.c.bf16 %v2242, %v2241
    %v2252 = vpack.c.bf16 %v2244, %v2243
    %v2253 = vld [vmem:[%s7] sm:$0xf]
    %v2254 = vld [vmem:[%s7 + $0x4] sm:$0xf]
    %v2255 = vld [vmem:[%s7 + $0x8] sm:$0xf]
    %v2256 = vld [vmem:[%s7 + $0xc] sm:$0xf]
    %v2261 = vunpack.c.l.b16 %v2253
    %v2262 = vunpack.c.l.b16 %v2254
    %v2263 = vunpack.c.l.b16 %v2255
    %v2264 = vunpack.c.l.b16 %v2256
    %v2265 = vpack.c.b16 %v2262, %v2261
    %v2266 = vpack.c.b16 %v2264, %v2263
    %v2270 = vsel %vm118, %v2245, 0
    %v2273 = vsel %vm118, %v2246, 0
    %v2276 = vsel %vm118, %v2247, 0
    %v2279 = vsel %vm118, %v2248, 0
    %v2282 = vsel %vm118, %v2249, 0
    %v2285 = vsel %vm118, %v2250, 0
    %v2288 = vsel %vm118, %v2251, 0
    %v2291 = vsel %vm118, %v2252, 0
    %2293 = vmatprep.subr.bf16.mxu0 0
    %2294 = vmatpush1.bf16.msra.mxu0 %v2265
    %2295 = vmatprep.subr.bf16.mxu0 0
    %2296 = vmatpush1.bf16.msra.mxu0 %v2266
    %2297 = vmatprep.subr.bf16.mxu0 0
    %2298 = vmatpush1.bf16.msra.mxu0 0
    %2299 = vmatprep.subr.bf16.mxu0 0
    %2300 = vmatpush1.bf16.msra.mxu0 0
    %2301 = vmatprep.subr.bf16.mxu0 0
    %2302 = vmatpush1.bf16.msra.mxu0 0
    %2303 = vmatprep.subr.bf16.mxu0 0
    %2304 = vmatpush1.bf16.msra.mxu0 0
    %2305 = vmatprep.subr.bf16.mxu0 0
    %2306 = vmatpush1.bf16.msra.mxu0 0
    %2307 = vmatprep.subr.bf16.mxu0 0
    %2308 = vmatpush1.bf16.msra.mxu0 0
    %2309 = vmatprep.subr.bf16.mxu0 0
    %2310 = vmatpush1.bf16.msra.mxu0 0
    %2311 = vmatprep.subr.bf16.mxu0 0
    %2312 = vmatpush1.bf16.msra.mxu0 0
    %2313 = vmatprep.subr.bf16.mxu0 0
    %2314 = vmatpush1.bf16.msra.mxu0 0
    %2315 = vmatprep.subr.bf16.mxu0 0
    %2316 = vmatpush1.bf16.msra.mxu0 0
    %2317 = vmatprep.subr.bf16.mxu0 0
    %2318 = vmatpush1.bf16.msra.mxu0 0
    %2319 = vmatprep.subr.bf16.mxu0 0
    %2320 = vmatpush1.bf16.msra.mxu0 0
    %2321 = vmatprep.subr.bf16.mxu0 0
    %2322 = vmatpush1.bf16.msra.mxu0 0
    %2323 = vmatprep.subr.bf16.mxu0 0
    %2324 = vmatpush1.bf16.msra.mxu0 0
    %2325 = vmatprep.mubr.bf16.mxu0 0
    %2326 = vmatmul.mubr.bf16.gmra.mrb[0].mxu0 %v2270
    %v2327 = vpop.f32.mrb[0].mxu0
    %v2328 = vadd.f32 0.0, %v2327
    %v2329 = vpop.f32.mrb[0].mxu0
    %v2330 = vpop.f32.mrb[0].mxu0
    %v2331 = vadd.f32 0.0, %v2330
    %v2332 = vpop.f32.mrb[0].mxu0
    %2333 = vmatprep.mubr.bf16.mxu0 0
    %2334 = vmatmul.mubr.bf16.gmra.mrb[0].mxu0 %v2273
    %v2335 = vpop.f32.mrb[0].mxu0
    %v2336 = vadd.f32 0.0, %v2335
    %v2337 = vpop.f32.mrb[0].mxu0
    %v2338 = vpop.f32.mrb[0].mxu0
    %v2339 = vadd.f32 0.0, %v2338
    %v2340 = vpop.f32.mrb[0].mxu0
    %2341 = vmatprep.mubr.bf16.mxu0 0
    %2342 = vmatmul.mubr.bf16.gmra.mrb[0].mxu0 %v2276
    %v2343 = vpop.f32.mrb[0].mxu0
    %v2344 = vadd.f32 0.0, %v2343
    %v2345 = vpop.f32.mrb[0].mxu0
    %v2346 = vpop.f32.mrb[0].mxu0
    %v2347 = vadd.f32 0.0, %v2346
    %v2348 = vpop.f32.mrb[0].mxu0
    %2349 = vmatprep.mubr.bf16.mxu0 0
    %2350 = vmatmul.mubr.bf16.gmra.mrb[0].mxu0 %v2279
    %v2351 = vpop.f32.mrb[0].mxu0
    %v2352 = vadd.f32 0.0, %v2351
    %v2353 = vpop.f32.mrb[0].mxu0
    %v2354 = vpop.f32.mrb[0].mxu0
    %v2355 = vadd.f32 0.0, %v2354
    %v2356 = vpop.f32.mrb[0].mxu0
    %2357 = vmatprep.mubr.bf16.mxu0 0
    %2358 = vmatmul.mubr.bf16.gmra.mrb[0].mxu0 %v2282
    %v2359 = vpop.f32.mrb[0].mxu0
    %v2360 = vadd.f32 0.0, %v2359
    %v2361 = vpop.f32.mrb[0].mxu0
    %v2362 = vpop.f32.mrb[0].mxu0
    %v2363 = vadd.f32 0.0, %v2362
    %v2364 = vpop.f32.mrb[0].mxu0
    %2365 = vmatprep.mubr.bf16.mxu0 0
    %2366 = vmatmul.mubr.bf16.gmra.mrb[0].mxu0 %v2285
    %v2367 = vpop.f32.mrb[0].mxu0
    %v2368 = vadd.f32 0.0, %v2367
    %v2369 = vpop.f32.mrb[0].mxu0
    %v2370 = vpop.f32.mrb[0].mxu0
    %v2371 = vadd.f32 0.0, %v2370
    %v2372 = vpop.f32.mrb[0].mxu0
    %2373 = vmatprep.mubr.bf16.mxu0 0
    %2374 = vmatmul.mubr.bf16.gmra.mrb[0].mxu0 %v2288
    %v2375 = vpop.f32.mrb[0].mxu0
    %v2376 = vadd.f32 0.0, %v2375
    %v2377 = vpop.f32.mrb[0].mxu0
    %v2378 = vpop.f32.mrb[0].mxu0
    %v2379 = vadd.f32 0.0, %v2378
    %v2380 = vpop.f32.mrb[0].mxu0
    %2381 = vmatprep.mubr.bf16.mxu0 0
    %2382 = vmatmul.mubr.bf16.gmra.mrb[0].mxu0 %v2291
    %v2383 = vpop.f32.mrb[0].mxu0
    %v2384 = vadd.f32 0.0, %v2383
    %v2385 = vpop.f32.mrb[0].mxu0
    %v2386 = vpop.f32.mrb[0].mxu0
    %v2387 = vadd.f32 0.0, %v2386
    %v2388 = vpop.f32.mrb[0].mxu0
    %2389 = vdwg.mxu0
    %v2390 = vld [vmem:[%s8] sm:$0x1]
    %v2391 = vld [vmem:[%s9] sm:$0x1]
    %v2392 = vsel %vm118, %v2328, 0.0
    %v2393 = vsel %vm118, %v2331, 0.0
    %v2394 = vadd.f32 %v2392, %v2393
    %v2395 = vsel %vm118, %v2336, 0.0
    %v2396 = vadd.f32 %v2394, %v2395
    %v2397 = vsel %vm118, %v2339, 0.0
    %v2398 = vadd.f32 %v2396, %v2397
    %v2399 = vsel %vm118, %v2344, 0.0
    %v2400 = vadd.f32 %v2398, %v2399
    %v2401 = vsel %vm118, %v2347, 0.0
    %v2402 = vadd.f32 %v2400, %v2401
    %v2403 = vsel %vm118, %v2352, 0.0
    %v2404 = vadd.f32 %v2402, %v2403
    %v2405 = vsel %vm118, %v2355, 0.0
    %v2406 = vadd.f32 %v2404, %v2405
    %v2407 = vsel %vm118, %v2360, 0.0
    %v2408 = vadd.f32 %v2406, %v2407
    %v2409 = vsel %vm118, %v2363, 0.0
    %v2410 = vadd.f32 %v2408, %v2409
    %v2411 = vsel %vm118, %v2368, 0.0
    %v2412 = vadd.f32 %v2410, %v2411
    %v2413 = vsel %vm118, %v2371, 0.0
    %v2414 = vadd.f32 %v2412, %v2413
    %v2415 = vsel %vm118, %v2376, 0.0
    %v2416 = vadd.f32 %v2414, %v2415
    %v2417 = vsel %vm118, %v2379, 0.0
    %v2418 = vadd.f32 %v2416, %v2417
    %v2419 = vsel %vm118, %v2384, 0.0
    %v2420 = vadd.f32 %v2418, %v2419
    %v2421 = vsel %vm118, %v2387, 0.0
    %v2422 = vadd.f32 %v2420, %v2421
    %v2423 = vrot.slane %v2422, 4
    %v2424 = vadd.f32 %v2422, %v2423
    %v2425 = vrot.slane %v2424, 2
    %v2426 = vadd.f32 %v2424, %v2425
    %v2427 = vrot.slane %v2426, 1
    %v2428 = vadd.f32 %v2426, %v2427
    %v2429 = vmul.f32 %v2428, %v279
    %v2430 = vsub.f32 %v2328, %v2429
    %v2431 = vsub.f32 %v2331, %v2429
    %v2432 = vsub.f32 %v2336, %v2429
    %v2433 = vsub.f32 %v2339, %v2429
    %v2434 = vsub.f32 %v2344, %v2429
    %v2435 = vsub.f32 %v2347, %v2429
    %v2436 = vsub.f32 %v2352, %v2429
    %v2437 = vsub.f32 %v2355, %v2429
    %v2438 = vsub.f32 %v2360, %v2429
    %v2439 = vsub.f32 %v2363, %v2429
    %v2440 = vsub.f32 %v2368, %v2429
    %v2441 = vsub.f32 %v2371, %v2429
    %v2442 = vsub.f32 %v2376, %v2429
    %v2443 = vsub.f32 %v2379, %v2429
    %v2444 = vsub.f32 %v2384, %v2429
    %v2445 = vsub.f32 %v2387, %v2429
    %v2446 = vmul.f32 %v2430, %v2430
    %v2447 = vmul.f32 %v2431, %v2431
    %v2448 = vmul.f32 %v2432, %v2432
    %v2449 = vmul.f32 %v2433, %v2433
    %v2450 = vmul.f32 %v2434, %v2434
    %v2451 = vmul.f32 %v2435, %v2435
    %v2452 = vmul.f32 %v2436, %v2436
    %v2453 = vmul.f32 %v2437, %v2437
    %v2454 = vmul.f32 %v2438, %v2438
    %v2455 = vmul.f32 %v2439, %v2439
    %v2456 = vmul.f32 %v2440, %v2440
    %v2457 = vmul.f32 %v2441, %v2441
    %v2458 = vmul.f32 %v2442, %v2442
    %v2459 = vmul.f32 %v2443, %v2443
    %v2460 = vmul.f32 %v2444, %v2444
    %v2461 = vmul.f32 %v2445, %v2445
    %v2462 = vsel %vm118, %v2446, 0.0
    %v2463 = vsel %vm118, %v2447, 0.0
    %v2464 = vadd.f32 %v2462, %v2463
    %v2465 = vsel %vm118, %v2448, 0.0
    %v2466 = vadd.f32 %v2464, %v2465
    %v2467 = vsel %vm118, %v2449, 0.0
    %v2468 = vadd.f32 %v2466, %v2467
    %v2469 = vsel %vm118, %v2450, 0.0
    %v2470 = vadd.f32 %v2468, %v2469
    %v2471 = vsel %vm118, %v2451, 0.0
    %v2472 = vadd.f32 %v2470, %v2471
    %v2473 = vsel %vm118, %v2452, 0.0
    %v2474 = vadd.f32 %v2472, %v2473
    %v2475 = vsel %vm118, %v2453, 0.0
    %v2476 = vadd.f32 %v2474, %v2475
    %v2477 = vsel %vm118, %v2454, 0.0
    %v2478 = vadd.f32 %v2476, %v2477
    %v2479 = vsel %vm118, %v2455, 0.0
    %v2480 = vadd.f32 %v2478, %v2479
    %v2481 = vsel %vm118, %v2456, 0.0
    %v2482 = vadd.f32 %v2480, %v2481
    %v2483 = vsel %vm118, %v2457, 0.0
    %v2484 = vadd.f32 %v2482, %v2483
    %v2485 = vsel %vm118, %v2458, 0.0
    %v2486 = vadd.f32 %v2484, %v2485
    %v2487 = vsel %vm118, %v2459, 0.0
    %v2488 = vadd.f32 %v2486, %v2487
    %v2489 = vsel %vm118, %v2460, 0.0
    %v2490 = vadd.f32 %v2488, %v2489
    %v2491 = vsel %vm118, %v2461, 0.0
    %v2492 = vadd.f32 %v2490, %v2491
    %v2493 = vrot.slane %v2492, 4
    %v2494 = vadd.f32 %v2492, %v2493
    %v2495 = vrot.slane %v2494, 2
    %v2496 = vadd.f32 %v2494, %v2495
    %v2497 = vrot.slane %v2496, 1
    %v2498 = vadd.f32 %v2496, %v2497
    %v2499 = vmul.f32 %v2498, %v279
    %v2500 = vadd.f32 %v2499, 1e-05
    %v2501 = vrsqrt.pop %v2500
    %v2502 = vmul.f32 %v2430, %v2501
    %v2503 = vmul.f32 %v2431, %v2501
    %v2504 = vmul.f32 %v2432, %v2501
    %v2505 = vmul.f32 %v2433, %v2501
    %v2506 = vmul.f32 %v2434, %v2501
    %v2507 = vmul.f32 %v2435, %v2501
    %v2508 = vmul.f32 %v2436, %v2501
    %v2509 = vmul.f32 %v2437, %v2501
    %v2510 = vmul.f32 %v2438, %v2501
    %v2511 = vmul.f32 %v2439, %v2501
    %v2512 = vmul.f32 %v2440, %v2501
    %v2513 = vmul.f32 %v2441, %v2501
    %v2514 = vmul.f32 %v2442, %v2501
    %v2515 = vmul.f32 %v2443, %v2501
    %v2516 = vmul.f32 %v2444, %v2501
    %v2517 = vmul.f32 %v2445, %v2501
    %v2519 = vlaneseq
    %v2520 = vshrl.u32 %v2519, 7
    %v2521 = vsub.s32 0, %v2520
    %v2522 = vrot.slane %v2390, %v2521
    %v2524 = vmul.f32 %v2502, %v2522
    %v2525 = vmul.f32 %v2503, %v2522
    %v2526 = vmul.f32 %v2504, %v2522
    %v2527 = vmul.f32 %v2505, %v2522
    %v2528 = vmul.f32 %v2506, %v2522
    %v2529 = vmul.f32 %v2507, %v2522
    %v2530 = vmul.f32 %v2508, %v2522
    %v2531 = vmul.f32 %v2509, %v2522
    %v2532 = vmul.f32 %v2510, %v2522
    %v2533 = vmul.f32 %v2511, %v2522
    %v2534 = vmul.f32 %v2512, %v2522
    %v2535 = vmul.f32 %v2513, %v2522
    %v2536 = vmul.f32 %v2514, %v2522
    %v2537 = vmul.f32 %v2515, %v2522
    %v2538 = vmul.f32 %v2516, %v2522
    %v2539 = vmul.f32 %v2517, %v2522
    %v2541 = vlaneseq
    %v2542 = vshrl.u32 %v2541, 7
    %v2543 = vsub.s32 0, %v2542
    %v2544 = vrot.slane %v2391, %v2543
    %v2546 = vadd.f32 %v2524, %v2544
    %v2547 = vadd.f32 %v2525, %v2544
    %v2548 = vadd.f32 %v2526, %v2544
    %v2549 = vadd.f32 %v2527, %v2544
    %v2550 = vadd.f32 %v2528, %v2544
    %v2551 = vadd.f32 %v2529, %v2544
    %v2552 = vadd.f32 %v2530, %v2544
    %v2553 = vadd.f32 %v2531, %v2544
    %v2554 = vadd.f32 %v2532, %v2544
    %v2555 = vadd.f32 %v2533, %v2544
    %v2556 = vadd.f32 %v2534, %v2544
    %v2557 = vadd.f32 %v2535, %v2544
    %v2558 = vadd.f32 %v2536, %v2544
    %v2559 = vadd.f32 %v2537, %v2544
    %v2560 = vadd.f32 %v2538, %v2544
    %v2561 = vadd.f32 %v2539, %v2544
    %v2562 = vadd.f32 %v2546, %v78
    %v2563 = vadd.f32 %v2547, %v79
    %v2564 = vadd.f32 %v2548, %v80
    %v2565 = vadd.f32 %v2549, %v81
    %v2566 = vadd.f32 %v2550, %v82
    %v2567 = vadd.f32 %v2551, %v83
    %v2568 = vadd.f32 %v2552, %v84
    %v2569 = vadd.f32 %v2553, %v85
    %v2570 = vadd.f32 %v2554, %v86
    %v2571 = vadd.f32 %v2555, %v87
    %v2572 = vadd.f32 %v2556, %v88
    %v2573 = vadd.f32 %v2557, %v89
    %v2574 = vadd.f32 %v2558, %v90
    %v2575 = vadd.f32 %v2559, %v91
    %v2576 = vadd.f32 %v2560, %v92
    %v2577 = vadd.f32 %v2561, %v93
    %v2578 = vmax.f32 %v2562, 0.0
    %v2579 = vmax.f32 %v2563, 0.0
    %v2580 = vmax.f32 %v2564, 0.0
    %v2581 = vmax.f32 %v2565, 0.0
    %v2582 = vmax.f32 %v2566, 0.0
    %v2583 = vmax.f32 %v2567, 0.0
    %v2584 = vmax.f32 %v2568, 0.0
    %v2585 = vmax.f32 %v2569, 0.0
    %v2586 = vmax.f32 %v2570, 0.0
    %v2587 = vmax.f32 %v2571, 0.0
    %v2588 = vmax.f32 %v2572, 0.0
    %v2589 = vmax.f32 %v2573, 0.0
    %v2590 = vmax.f32 %v2574, 0.0
    %v2591 = vmax.f32 %v2575, 0.0
    %v2592 = vmax.f32 %v2576, 0.0
    %v2593 = vmax.f32 %v2577, 0.0
    %2594 = vst.msk [vmem:[#allocation9] sm:$0xff] %vm118, %v2578
    %2595 = vst.msk [vmem:[#allocation9 + $0x8] sm:$0xff] %vm118, %v2579
    %2596 = vst.msk [vmem:[#allocation9 + $0x10] sm:$0xff] %vm118, %v2580
    %2597 = vst.msk [vmem:[#allocation9 + $0x18] sm:$0xff] %vm118, %v2581
    %2598 = vst.msk [vmem:[#allocation9 + $0x20] sm:$0xff] %vm118, %v2582
    %2599 = vst.msk [vmem:[#allocation9 + $0x28] sm:$0xff] %vm118, %v2583
    %2600 = vst.msk [vmem:[#allocation9 + $0x30] sm:$0xff] %vm118, %v2584
    %2601 = vst.msk [vmem:[#allocation9 + $0x38] sm:$0xff] %vm118, %v2585
    %2602 = vst.msk [vmem:[#allocation9 + $0x40] sm:$0xff] %vm118, %v2586
    %2603 = vst.msk [vmem:[#allocation9 + $0x48] sm:$0xff] %vm118, %v2587
    %2604 = vst.msk [vmem:[#allocation9 + $0x50] sm:$0xff] %vm118, %v2588
    %2605 = vst.msk [vmem:[#allocation9 + $0x58] sm:$0xff] %vm118, %v2589
    %2606 = vst.msk [vmem:[#allocation9 + $0x60] sm:$0xff] %vm118, %v2590
    %2607 = vst.msk [vmem:[#allocation9 + $0x68] sm:$0xff] %vm118, %v2591
    %2608 = vst.msk [vmem:[#allocation9 + $0x70] sm:$0xff] %vm118, %v2592
    %2609 = vst.msk [vmem:[#allocation9 + $0x78] sm:$0xff] %vm118, %v2593
    // Predicated region
    $region54: #{_forward.1} parent=1 // pred_check
      _
    $region55: #{_forward.1} parent=1 // pred_check_branch
      %2611 = sbr.rel (0) target = $region57
    $region56: #{_forward.1} parent=1 // pred_region
      %s2613 = ssub.s32 2048, 2048
      %2614 = vsyncadd [#allocation5], %s2613
      %s2615 = sshll.u32 [#allocation9], 4
      %s2616 = int_to_ptr.vmem [resolvable:$true] %s2615
      %2621 = dma.vmem_to_hbm [thread:$0]  %s2616, 2048, %s10, [#allocation5], 128, 128, 8
    $region57: #{_forward.1} parent=1 // pred_fallthru
      _
    // Predicated region
    $region58: #{_forward.1} parent=1 // pred_check
      _
    $region59: #{_forward.1} parent=1 // pred_check_branch
      %2623 = sbr.rel (0) target = $region61
    $region60: #{_forward.1} parent=1 // pred_region
      %2624 = dma.done [#allocation5], 2048
    $region61: #{_forward.1} parent=1 // pred_fallthru
      _
    %2625 = vsyncpa [#allocation4], 1
    %2626 = vsyncpa [#allocation7], 1
    %2627 = vsyncpa [#allocation5], 1

</llo_original>
